<compile_context>
chip_gen: v6e
topology: v6e:2x2x1
jax: 0.10.0
libtpu: 0.0.40
codegen_flags: <defaults>
</compile_context>

<pallas_src>
import functools
import math

import jax
import jax.numpy as jnp
from jax.experimental import pallas as pl
from jax.experimental.pallas import tpu as pltpu


def _split_heads(x, num_heads, head_dim, dtype):
    """(T, dim) -> (H, T, hd) via static lane slices + stack (Mosaic-safe)."""
    return jnp.stack(
        [x[:, h * head_dim:(h + 1) * head_dim] for h in range(num_heads)],
        axis=0).astype(dtype)


def _attention_block_kernel(q_ref, k_ref, v_ref,
                            wq_ref, bq_ref, wk_ref, bk_ref,
                            wv_ref, bv_ref, wp_ref, bp_ref,
                            o_ref,
                            qh_scr, m_scr, l_scr, acc_scr,
                            *, num_heads, head_dim, compute_dtype, exp_in_bf16):
    """Grid step = (batch, L-tile, S-tile).  Fuses flat q/k/v projections,
    flash (online-softmax) multi-head attention over S tiles, and the output
    projection."""
    H, hd = num_heads, head_dim
    cd = compute_dtype
    tq = q_ref.shape[1]
    tk = k_ref.shape[1]
    dim = wq_ref.shape[1]
    scale = 1.0 / math.sqrt(hd)
    j = pl.program_id(2)

    @pl.when(j == 0)
    def _init():
        # Flat projection: full N=dim MXU output columns (no per-head underfill).
        qp = jnp.dot(q_ref[0], wq_ref[...],
                     preferred_element_type=jnp.float32) + bq_ref[...]  # (tq, dim) f32
        qp = qp * scale                       # fold 1/sqrt(hd) into q (O(tq*dim))
        qh_scr[...] = _split_heads(qp, H, hd, cd)          # (H, tq, hd)
        m_scr[...] = jnp.full_like(m_scr, -jnp.inf)
        l_scr[...] = jnp.zeros_like(l_scr)
        acc_scr[...] = jnp.zeros_like(acc_scr)

    # K / V projections of the current S tile: flat matmuls, then one
    # head-split pass each.
    kp = jnp.dot(k_ref[0], wk_ref[...],
                 preferred_element_type=jnp.float32) + bk_ref[...]      # (tk, dim) f32
    vp = jnp.dot(v_ref[0], wv_ref[...],
                 preferred_element_type=jnp.float32) + bv_ref[...]      # (tk, dim) f32
    kh = _split_heads(kp, H, hd, cd)                                    # (H, tk, hd)
    vh = _split_heads(vp, H, hd, cd)                                    # (H, tk, hd)

    # Scores: leading-batch (heads) matmul, contraction over hd; f32 accumulate.
    s = jnp.einsum('hld,hsd->hls', qh_scr[...], kh,
                   preferred_element_type=jnp.float32)                  # (H, tq, tk)

    # Online softmax.  Running statistics stay f32 (v5e has no bf16 VPU/EUP).
    m_prev = m_scr[...]
    m_new = jnp.maximum(m_prev, jnp.max(s, axis=-1, keepdims=True))
    alpha = jnp.exp(m_prev - m_new)
    if exp_in_bf16:
        # v6e/v7x-only path: bf16 EUP exp; row-sum still accumulates in f32.
        p = jnp.exp((s - m_new).astype(jnp.bfloat16))
        row_sum = jnp.sum(p, axis=-1, keepdims=True, dtype=jnp.float32)
        pv = p
    else:
        p = jnp.exp(s - m_new)
        row_sum = jnp.sum(p, axis=-1, keepdims=True)
        pv = p.astype(cd)
    l_scr[...] = alpha * l_scr[...] + row_sum
    acc_scr[...] = alpha * acc_scr[...] + jnp.einsum(
        'hls,hsd->hld', pv, vh, preferred_element_type=jnp.float32)     # (H, tq, hd)
    m_scr[...] = m_new

    @pl.when(j == pl.num_programs(2) - 1)
    def _finalize():
        # Normalize AFTER the PV matmul (O(H*tq*hd) instead of O(H*tq*tk)).
        ctx = acc_scr[...] * pl.reciprocal(l_scr[...], approx=True)     # (H, tq, hd)
        # Concat heads back onto lanes -> (tq, dim); the head reduction then
        # happens inside the MXU accumulator of one flat output projection.
        ctx2 = jnp.concatenate(
            [ctx[h] for h in range(H)], axis=-1).astype(cd)             # (tq, dim)
        out = jnp.dot(ctx2, wp_ref[...],
                      preferred_element_type=jnp.float32) + bp_ref[...]
        o_ref[0] = out.astype(o_ref.dtype)


def _pick_tile(n, target):
    """Largest sublane-aligned tile <= target that evenly divides n."""
    if n <= target:
        return n
    for t in range(target, 7, -1):
        if t % 8 == 0 and n % t == 0:
            return t
    # TODO(synk): pad ragged L/S instead of falling back to a full block.
    return n


def attention_block(q, k, v, params, num_heads, *,
                    compute_dtype=jnp.bfloat16,
                    tq_target=512, tk_target=512,   # sized for v7x's 64 MiB VMEM
                    exp_in_bf16=False,              # enable on v6e/v7x only
                    vmem_limit_bytes=48 * 1024 * 1024):
    out_dtype = q.dtype
    B, L, dim_q = q.shape
    _, S, dim_k = k.shape
    _, _, dim_v = v.shape
    wq, bq, wk, bk, wv, bv, wp, bp = params
    dim = wq.shape[1]
    H = num_heads
    hd = dim // H

    # Stream activations and weights in the matmul compute dtype (halves
    # HBM->VMEM DMA and removes per-step VPU cast passes).  Biases stay f32.
    q = q.astype(compute_dtype)
    k = k.astype(compute_dtype)
    v = v.astype(compute_dtype)
    wq_c, wk_c, wv_c, wp_c = (w.astype(compute_dtype) for w in (wq, wk, wv, wp))

    tq = _pick_tile(L, tq_target)
    tk = _pick_tile(S, tk_target)
    nL = L // tq
    nS = S // tk

    kernel = functools.partial(
        _attention_block_kernel, num_heads=H, head_dim=hd,
        compute_dtype=compute_dtype, exp_in_bf16=exp_in_bf16)

    def const_spec(shape):
        zeros = (0,) * len(shape)
        return pl.BlockSpec(shape, lambda b, i, j: zeros)

    return pl.pallas_call(
        kernel,
        out_shape=jax.ShapeDtypeStruct((B, L, dim), out_dtype),
        grid_spec=pltpu.PrefetchScalarGridSpec(
            num_scalar_prefetch=0,
            grid=(B, nL, nS),
            in_specs=[
                pl.BlockSpec((1, tq, dim_q), lambda b, i, j: (b, i, 0)),
                pl.BlockSpec((1, tk, dim_k), lambda b, i, j: (b, j, 0)),
                pl.BlockSpec((1, tk, dim_v), lambda b, i, j: (b, j, 0)),
                const_spec(wq_c.shape), const_spec(bq.shape),
                const_spec(wk_c.shape), const_spec(bk.shape),
                const_spec(wv_c.shape), const_spec(bv.shape),
                const_spec(wp_c.shape), const_spec(bp.shape),
            ],
            out_specs=pl.BlockSpec((1, tq, dim), lambda b, i, j: (b, i, 0)),
            scratch_shapes=[
                pltpu.VMEM((H, tq, hd), compute_dtype),   # projected, scaled q
                pltpu.VMEM((H, tq, 1), jnp.float32),      # running max
                pltpu.VMEM((H, tq, 1), jnp.float32),      # running sum
                pltpu.VMEM((H, tq, hd), jnp.float32),     # running context
            ]),
        compiler_params=pltpu.CompilerParams(
            dimension_semantics=("parallel", "parallel", "arbitrary"),
            vmem_limit_bytes=vmem_limit_bytes),
    )(q, k, v, wq_c, bq, wk_c, bk, wv_c, bv, wp_c, bp)


def attention_block_reference(q, k, v, params, num_heads):
    """Pure-JAX f32 mirror of the PyTorch forward (default args, eval mode)."""
    wq, bq, wk, bk, wv, bv, wp, bp = params
    q = q @ wq + bq[0]
    k = k @ wk + bk[0]
    v = v @ wv + bv[0]
    hd = q.shape[-1] // num_heads
    # torch.cat(x.split(hd, -1), dim=0): heads stacked over batch (h*B + b)
    qh = jnp.concatenate(jnp.split(q, num_heads, axis=-1), axis=0)
    kh = jnp.concatenate(jnp.split(k, num_heads, axis=-1), axis=0)
    vh = jnp.concatenate(jnp.split(v, num_heads, axis=-1), axis=0)
    s = jnp.einsum('bld,bsd->bls', qh, kh) / math.sqrt(hd)
    p = jax.nn.softmax(s, axis=-1)
    o = jnp.einsum('bls,bsd->bld', p, vh)
    # rearrange '(nH B) L d -> B L (nH d)'
    o = jnp.concatenate(jnp.split(o, num_heads, axis=0), axis=-1)
    return o @ wp + bp[0]


if __name__ == "__main__":
    # Small, deterministic configuration.
    B, L, S = 2, 8, 16
    dim_q, dim_k, dim_v = 16, 16, 16
    dim, num_heads = 32, 4

    key = jax.random.PRNGKey(0)
    keys = jax.random.split(key, 12)

    q = jax.random.normal(keys[0], (B, L, dim_q), jnp.float32)
    k = jax.random.normal(keys[1], (B, S, dim_k), jnp.float32)
    v = jax.random.normal(keys[2], (B, S, dim_v), jnp.float32)

    def make_linear(kw, kb, din, dout):
        # nn.Linear-like init, stored as (in, out) + (1, out).
        bound = 1.0 / math.sqrt(din)
        w = jax.random.uniform(kw, (din, dout), jnp.float32, -bound, bound)
        b = jax.random.uniform(kb, (1, dout), jnp.float32, -bound, bound)
        return w, b

    wq, bq = make_linear(keys[3], keys[4], dim_q, dim)
    wk, bk = make_linear(keys[5], keys[6], dim_k, dim)
    wv, bv = make_linear(keys[7], keys[8], dim_v, dim)
    wp, bp = make_linear(keys[9], keys[10], dim, dim)
    params = (wq, bq, wk, bk, wv, bv, wp, bp)

    out = attention_block(q, k, v, params, num_heads)
    out = jax.block_until_ready(out)

    ref = attention_block_reference(q, k, v, params, num_heads)
    assert out.shape == (B, L, dim)
    # bf16 matmul operands/activations + approx reciprocal -> loosened tolerance.
    assert jnp.allclose(out, ref, atol=5e-2, rtol=5e-2), \
        f"max err {jnp.max(jnp.abs(out - ref))}"

    print("KERNEL_OK")
</pallas_src>

<mosaic_0001>
module attributes {stable_mosaic.version = 11 : i64} {
  func.func @_attention_block_kernel(%arg0: i32, %arg1: i32, %arg2: i32, %arg3: memref<1x8x16xbf16, #tpu.memory_space<vmem>>, %arg4: memref<1x16x16xbf16, #tpu.memory_space<vmem>>, %arg5: memref<1x16x16xbf16, #tpu.memory_space<vmem>>, %arg6: memref<16x32xbf16, #tpu.memory_space<vmem>>, %arg7: memref<1x32xf32, #tpu.memory_space<vmem>>, %arg8: memref<16x32xbf16, #tpu.memory_space<vmem>>, %arg9: memref<1x32xf32, #tpu.memory_space<vmem>>, %arg10: memref<16x32xbf16, #tpu.memory_space<vmem>>, %arg11: memref<1x32xf32, #tpu.memory_space<vmem>>, %arg12: memref<32x32xbf16, #tpu.memory_space<vmem>>, %arg13: memref<1x32xf32, #tpu.memory_space<vmem>>, %arg14: memref<1x8x32xf32, #tpu.memory_space<vmem>>, %arg15: memref<4x8x8xbf16, #tpu.memory_space<vmem>>, %arg16: memref<4x8x1xf32, #tpu.memory_space<vmem>>, %arg17: memref<4x8x1xf32, #tpu.memory_space<vmem>>, %arg18: memref<4x8x8xf32, #tpu.memory_space<vmem>>) attributes {dimension_semantics = [#tpu.dimension_semantics<parallel>, #tpu.dimension_semantics<parallel>, #tpu.dimension_semantics<arbitrary>], iteration_bounds = array<i64: 2, 1, 1>, scalar_prefetch = 0 : i64, scratch_operands = 4 : i64, tpu.core_type = #tpu.core_type<tc>, window_params = [{transform_indices = @transform_0, window_bounds = array<i64: 1, 8, 16>}, {transform_indices = @transform_1, window_bounds = array<i64: 1, 16, 16>}, {transform_indices = @transform_2, window_bounds = array<i64: 1, 16, 16>}, {pipeline_mode = #tpu.pipeline_mode<synchronous>, transform_indices = @transform_3, window_bounds = array<i64: 16, 32>}, {pipeline_mode = #tpu.pipeline_mode<synchronous>, transform_indices = @transform_4, window_bounds = array<i64: 1, 32>}, {pipeline_mode = #tpu.pipeline_mode<synchronous>, transform_indices = @transform_5, window_bounds = array<i64: 16, 32>}, {pipeline_mode = #tpu.pipeline_mode<synchronous>, transform_indices = @transform_6, window_bounds = array<i64: 1, 32>}, {pipeline_mode = #tpu.pipeline_mode<synchronous>, transform_indices = @transform_7, window_bounds = array<i64: 16, 32>}, {pipeline_mode = #tpu.pipeline_mode<synchronous>, transform_indices = @transform_8, window_bounds = array<i64: 1, 32>}, {pipeline_mode = #tpu.pipeline_mode<synchronous>, transform_indices = @transform_9, window_bounds = array<i64: 32, 32>}, {pipeline_mode = #tpu.pipeline_mode<synchronous>, transform_indices = @transform_10, window_bounds = array<i64: 1, 32>}, {transform_indices = @transform_11, window_bounds = array<i64: 1, 8, 32>}]} {
    %c0_i32 = arith.constant 0 : i32
    %0 = arith.cmpi eq, %arg2, %c0_i32 : i32
    %1 = arith.extui %0 : i1 to i32
    %c0_i32_0 = arith.constant 0 : i32
    %2 = arith.cmpi ne, %1, %c0_i32_0 : i32
    scf.if %2 {
      %c0_42 = arith.constant 0 : index
      %c0_43 = arith.constant 0 : index
      %c0_44 = arith.constant 0 : index
      %65 = vector.load %arg3[%c0_42, %c0_43, %c0_44] : memref<1x8x16xbf16, #tpu.memory_space<vmem>>, vector<1x8x16xbf16>
      %66 = vector.shape_cast %65 : vector<1x8x16xbf16> to vector<8x16xbf16>
      %c0_45 = arith.constant 0 : index
      %c0_46 = arith.constant 0 : index
      %67 = vector.load %arg6[%c0_45, %c0_46] : memref<16x32xbf16, #tpu.memory_space<vmem>>, vector<16x32xbf16>
      %cst_47 = arith.constant dense<0.000000e+00> : vector<8x32xf32>
      %68 = tpu.matmul %66, %67, %cst_47 {dimension_numbers = #tpu.dot_dimension_numbers<[1], [0], [0], [1], [0, 0, 1, 1], [], []>} : vector<8x16xbf16>, vector<16x32xbf16>, vector<8x32xf32> -> vector<8x32xf32>
      %c0_48 = arith.constant 0 : index
      %c0_49 = arith.constant 0 : index
      %69 = vector.load %arg7[%c0_48, %c0_49] : memref<1x32xf32, #tpu.memory_space<vmem>>, vector<1x32xf32>
      %70 = vector.broadcast %69 : vector<1x32xf32> to vector<8x32xf32>
      %71 = arith.addf %68, %70 : vector<8x32xf32>
      %cst_50 = arith.constant 0.353553385 : f32
      %72 = vector.broadcast %cst_50 : f32 to vector<8x32xf32>
      %73 = arith.mulf %71, %72 : vector<8x32xf32>
      %74 = vector.extract_strided_slice %73 {offsets = [0, 0], sizes = [8, 8], strides = [1, 1]} : vector<8x32xf32> to vector<8x8xf32>
      %75 = vector.extract_strided_slice %73 {offsets = [0, 8], sizes = [8, 8], strides = [1, 1]} : vector<8x32xf32> to vector<8x8xf32>
      %76 = vector.extract_strided_slice %73 {offsets = [0, 16], sizes = [8, 8], strides = [1, 1]} : vector<8x32xf32> to vector<8x8xf32>
      %77 = vector.extract_strided_slice %73 {offsets = [0, 24], sizes = [8, 8], strides = [1, 1]} : vector<8x32xf32> to vector<8x8xf32>
      %78 = vector.shape_cast %74 : vector<8x8xf32> to vector<1x8x8xf32>
      %79 = vector.shape_cast %75 : vector<8x8xf32> to vector<1x8x8xf32>
      %80 = vector.shape_cast %76 : vector<8x8xf32> to vector<1x8x8xf32>
      %81 = vector.shape_cast %77 : vector<8x8xf32> to vector<1x8x8xf32>
      %82 = tpu.concatenate %78, %79, %80, %81 in 0 : vector<1x8x8xf32>, vector<1x8x8xf32>, vector<1x8x8xf32>, vector<1x8x8xf32> -> vector<4x8x8xf32>
      %83 = arith.truncf %82 : vector<4x8x8xf32> to vector<4x8x8xbf16>
      %c0_51 = arith.constant 0 : index
      %c0_52 = arith.constant 0 : index
      %c0_53 = arith.constant 0 : index
      %84 = vector.load %arg15[%c0_51, %c0_52, %c0_53] : memref<4x8x8xbf16, #tpu.memory_space<vmem>>, vector<4x8x8xbf16>
      tpu.vector_store %arg15[%c0_51, %c0_52, %c0_53], %83 {strides = array<i32>} : memref<4x8x8xbf16, #tpu.memory_space<vmem>>, vector<4x8x8xbf16>,
      %cst_54 = arith.constant 0xFF800000 : f32
      %85 = vector.broadcast %cst_54 : f32 to vector<4x8x1xf32>
      %c0_55 = arith.constant 0 : index
      %c0_56 = arith.constant 0 : index
      %c0_57 = arith.constant 0 : index
      %86 = vector.load %arg16[%c0_55, %c0_56, %c0_57] : memref<4x8x1xf32, #tpu.memory_space<vmem>>, vector<4x8x1xf32>
      tpu.vector_store %arg16[%c0_55, %c0_56, %c0_57], %85 {strides = array<i32>} : memref<4x8x1xf32, #tpu.memory_space<vmem>>, vector<4x8x1xf32>,
      %cst_58 = arith.constant 0.000000e+00 : f32
      %87 = vector.broadcast %cst_58 : f32 to vector<4x8x1xf32>
      %c0_59 = arith.constant 0 : index
      %c0_60 = arith.constant 0 : index
      %c0_61 = arith.constant 0 : index
      %88 = vector.load %arg17[%c0_59, %c0_60, %c0_61] : memref<4x8x1xf32, #tpu.memory_space<vmem>>, vector<4x8x1xf32>
      tpu.vector_store %arg17[%c0_59, %c0_60, %c0_61], %87 {strides = array<i32>} : memref<4x8x1xf32, #tpu.memory_space<vmem>>, vector<4x8x1xf32>,
      %cst_62 = arith.constant 0.000000e+00 : f32
      %89 = vector.broadcast %cst_62 : f32 to vector<4x8x8xf32>
      %c0_63 = arith.constant 0 : index
      %c0_64 = arith.constant 0 : index
      %c0_65 = arith.constant 0 : index
      %90 = vector.load %arg18[%c0_63, %c0_64, %c0_65] : memref<4x8x8xf32, #tpu.memory_space<vmem>>, vector<4x8x8xf32>
      tpu.vector_store %arg18[%c0_63, %c0_64, %c0_65], %89 {strides = array<i32>} : memref<4x8x8xf32, #tpu.memory_space<vmem>>, vector<4x8x8xf32>,
    } else {
    }
    %c0 = arith.constant 0 : index
    %c0_1 = arith.constant 0 : index
    %c0_2 = arith.constant 0 : index
    %3 = vector.load %arg4[%c0, %c0_1, %c0_2] : memref<1x16x16xbf16, #tpu.memory_space<vmem>>, vector<1x16x16xbf16>
    %4 = vector.shape_cast %3 : vector<1x16x16xbf16> to vector<16x16xbf16>
    %c0_3 = arith.constant 0 : index
    %c0_4 = arith.constant 0 : index
    %5 = vector.load %arg8[%c0_3, %c0_4] : memref<16x32xbf16, #tpu.memory_space<vmem>>, vector<16x32xbf16>
    %cst = arith.constant dense<0.000000e+00> : vector<16x32xf32>
    %6 = tpu.matmul %4, %5, %cst {dimension_numbers = #tpu.dot_dimension_numbers<[1], [0], [0], [1], [0, 0, 1, 1], [], []>} : vector<16x16xbf16>, vector<16x32xbf16>, vector<16x32xf32> -> vector<16x32xf32>
    %c0_5 = arith.constant 0 : index
    %c0_6 = arith.constant 0 : index
    %7 = vector.load %arg9[%c0_5, %c0_6] : memref<1x32xf32, #tpu.memory_space<vmem>>, vector<1x32xf32>
    %8 = vector.broadcast %7 : vector<1x32xf32> to vector<16x32xf32>
    %9 = arith.addf %6, %8 : vector<16x32xf32>
    %c0_7 = arith.constant 0 : index
    %c0_8 = arith.constant 0 : index
    %c0_9 = arith.constant 0 : index
    %10 = vector.load %arg5[%c0_7, %c0_8, %c0_9] : memref<1x16x16xbf16, #tpu.memory_space<vmem>>, vector<1x16x16xbf16>
    %11 = vector.shape_cast %10 : vector<1x16x16xbf16> to vector<16x16xbf16>
    %c0_10 = arith.constant 0 : index
    %c0_11 = arith.constant 0 : index
    %12 = vector.load %arg10[%c0_10, %c0_11] : memref<16x32xbf16, #tpu.memory_space<vmem>>, vector<16x32xbf16>
    %cst_12 = arith.constant dense<0.000000e+00> : vector<16x32xf32>
    %13 = tpu.matmul %11, %12, %cst_12 {dimension_numbers = #tpu.dot_dimension_numbers<[1], [0], [0], [1], [0, 0, 1, 1], [], []>} : vector<16x16xbf16>, vector<16x32xbf16>, vector<16x32xf32> -> vector<16x32xf32>
    %c0_13 = arith.constant 0 : index
    %c0_14 = arith.constant 0 : index
    %14 = vector.load %arg11[%c0_13, %c0_14] : memref<1x32xf32, #tpu.memory_space<vmem>>, vector<1x32xf32>
    %15 = vector.broadcast %14 : vector<1x32xf32> to vector<16x32xf32>
    %16 = arith.addf %13, %15 : vector<16x32xf32>
    %17 = vector.extract_strided_slice %9 {offsets = [0, 0], sizes = [16, 8], strides = [1, 1]} : vector<16x32xf32> to vector<16x8xf32>
    %18 = vector.extract_strided_slice %9 {offsets = [0, 8], sizes = [16, 8], strides = [1, 1]} : vector<16x32xf32> to vector<16x8xf32>
    %19 = vector.extract_strided_slice %9 {offsets = [0, 16], sizes = [16, 8], strides = [1, 1]} : vector<16x32xf32> to vector<16x8xf32>
    %20 = vector.extract_strided_slice %9 {offsets = [0, 24], sizes = [16, 8], strides = [1, 1]} : vector<16x32xf32> to vector<16x8xf32>
    %21 = vector.shape_cast %17 : vector<16x8xf32> to vector<1x16x8xf32>
    %22 = vector.shape_cast %18 : vector<16x8xf32> to vector<1x16x8xf32>
    %23 = vector.shape_cast %19 : vector<16x8xf32> to vector<1x16x8xf32>
    %24 = vector.shape_cast %20 : vector<16x8xf32> to vector<1x16x8xf32>
    %25 = tpu.concatenate %21, %22, %23, %24 in 0 : vector<1x16x8xf32>, vector<1x16x8xf32>, vector<1x16x8xf32>, vector<1x16x8xf32> -> vector<4x16x8xf32>
    %26 = arith.truncf %25 : vector<4x16x8xf32> to vector<4x16x8xbf16>
    %27 = vector.extract_strided_slice %16 {offsets = [0, 0], sizes = [16, 8], strides = [1, 1]} : vector<16x32xf32> to vector<16x8xf32>
    %28 = vector.extract_strided_slice %16 {offsets = [0, 8], sizes = [16, 8], strides = [1, 1]} : vector<16x32xf32> to vector<16x8xf32>
    %29 = vector.extract_strided_slice %16 {offsets = [0, 16], sizes = [16, 8], strides = [1, 1]} : vector<16x32xf32> to vector<16x8xf32>
    %30 = vector.extract_strided_slice %16 {offsets = [0, 24], sizes = [16, 8], strides = [1, 1]} : vector<16x32xf32> to vector<16x8xf32>
    %31 = vector.shape_cast %27 : vector<16x8xf32> to vector<1x16x8xf32>
    %32 = vector.shape_cast %28 : vector<16x8xf32> to vector<1x16x8xf32>
    %33 = vector.shape_cast %29 : vector<16x8xf32> to vector<1x16x8xf32>
    %34 = vector.shape_cast %30 : vector<16x8xf32> to vector<1x16x8xf32>
    %35 = tpu.concatenate %31, %32, %33, %34 in 0 : vector<1x16x8xf32>, vector<1x16x8xf32>, vector<1x16x8xf32>, vector<1x16x8xf32> -> vector<4x16x8xf32>
    %36 = arith.truncf %35 : vector<4x16x8xf32> to vector<4x16x8xbf16>
    %c0_15 = arith.constant 0 : index
    %c0_16 = arith.constant 0 : index
    %c0_17 = arith.constant 0 : index
    %37 = vector.load %arg15[%c0_15, %c0_16, %c0_17] : memref<4x8x8xbf16, #tpu.memory_space<vmem>>, vector<4x8x8xbf16>
    "tpu.trace_start"() <{level = 10 : i32, message = "hld,hsd->hls"}> : () -> ()
    %cst_18 = arith.constant dense<0.000000e+00> : vector<4x8x16xf32>
    %38 = tpu.matmul %37, %26, %cst_18 {dimension_numbers = #tpu.dot_dimension_numbers<[2], [2], [1], [1], [0, 0, 0, 1, 1, 1], [0], [0]>} : vector<4x8x8xbf16>, vector<4x16x8xbf16>, vector<4x8x16xf32> -> vector<4x8x16xf32>
    "tpu.trace_stop"() : () -> ()
    %c0_19 = arith.constant 0 : index
    %c0_20 = arith.constant 0 : index
    %c0_21 = arith.constant 0 : index
    %39 = vector.load %arg16[%c0_19, %c0_20, %c0_21] : memref<4x8x1xf32, #tpu.memory_space<vmem>>, vector<4x8x1xf32>
    %cst_22 = arith.constant dense<0xFF800000> : vector<4x8xf32>
    %40 = vector.multi_reduction <maximumf>, %38, %cst_22 [2] : vector<4x8x16xf32> to vector<4x8xf32>
    %41 = vector.shape_cast %40 : vector<4x8xf32> to vector<4x8x1xf32>
    %42 = arith.maximumf %39, %41 : vector<4x8x1xf32>
    %43 = arith.subf %39, %42 : vector<4x8x1xf32>
    %44 = math.exp %43 : vector<4x8x1xf32>
    %45 = vector.broadcast %42 : vector<4x8x1xf32> to vector<4x8x16xf32>
    %46 = arith.subf %38, %45 : vector<4x8x16xf32>
    %47 = math.exp %46 : vector<4x8x16xf32>
    %cst_23 = arith.constant dense<0.000000e+00> : vector<4x8xf32>
    %48 = vector.multi_reduction <add>, %47, %cst_23 [2] : vector<4x8x16xf32> to vector<4x8xf32>
    %49 = vector.shape_cast %48 : vector<4x8xf32> to vector<4x8x1xf32>
    %50 = arith.truncf %47 : vector<4x8x16xf32> to vector<4x8x16xbf16>
    %c0_24 = arith.constant 0 : index
    %c0_25 = arith.constant 0 : index
    %c0_26 = arith.constant 0 : index
    %51 = vector.load %arg17[%c0_24, %c0_25, %c0_26] : memref<4x8x1xf32, #tpu.memory_space<vmem>>, vector<4x8x1xf32>
    %52 = arith.mulf %44, %51 : vector<4x8x1xf32>
    %53 = arith.addf %52, %49 : vector<4x8x1xf32>
    %c0_27 = arith.constant 0 : index
    %c0_28 = arith.constant 0 : index
    %c0_29 = arith.constant 0 : index
    %54 = vector.load %arg17[%c0_27, %c0_28, %c0_29] : memref<4x8x1xf32, #tpu.memory_space<vmem>>, vector<4x8x1xf32>
    tpu.vector_store %arg17[%c0_27, %c0_28, %c0_29], %53 {strides = array<i32>} : memref<4x8x1xf32, #tpu.memory_space<vmem>>, vector<4x8x1xf32>,
    %c0_30 = arith.constant 0 : index
    %c0_31 = arith.constant 0 : index
    %c0_32 = arith.constant 0 : index
    %55 = vector.load %arg18[%c0_30, %c0_31, %c0_32] : memref<4x8x8xf32, #tpu.memory_space<vmem>>, vector<4x8x8xf32>
    %56 = vector.broadcast %44 : vector<4x8x1xf32> to vector<4x8x8xf32>
    %57 = arith.mulf %56, %55 : vector<4x8x8xf32>
    "tpu.trace_start"() <{level = 10 : i32, message = "hls,hsd->hld"}> : () -> ()
    %cst_33 = arith.constant dense<0.000000e+00> : vector<4x8x8xf32>
    %58 = tpu.matmul %50, %36, %cst_33 {dimension_numbers = #tpu.dot_dimension_numbers<[2], [1], [1], [2], [0, 0, 0, 1, 1, 2], [0], [0]>} : vector<4x8x16xbf16>, vector<4x16x8xbf16>, vector<4x8x8xf32> -> vector<4x8x8xf32>
    "tpu.trace_stop"() : () -> ()
    %59 = arith.addf %57, %58 : vector<4x8x8xf32>
    %c0_34 = arith.constant 0 : index
    %c0_35 = arith.constant 0 : index
    %c0_36 = arith.constant 0 : index
    %60 = vector.load %arg18[%c0_34, %c0_35, %c0_36] : memref<4x8x8xf32, #tpu.memory_space<vmem>>, vector<4x8x8xf32>
    tpu.vector_store %arg18[%c0_34, %c0_35, %c0_36], %59 {strides = array<i32>} : memref<4x8x8xf32, #tpu.memory_space<vmem>>, vector<4x8x8xf32>,
    %c0_37 = arith.constant 0 : index
    %c0_38 = arith.constant 0 : index
    %c0_39 = arith.constant 0 : index
    %61 = vector.load %arg16[%c0_37, %c0_38, %c0_39] : memref<4x8x1xf32, #tpu.memory_space<vmem>>, vector<4x8x1xf32>
    tpu.vector_store %arg16[%c0_37, %c0_38, %c0_39], %42 {strides = array<i32>} : memref<4x8x1xf32, #tpu.memory_space<vmem>>, vector<4x8x1xf32>,
    %c0_i32_40 = arith.constant 0 : i32
    %62 = arith.cmpi eq, %arg2, %c0_i32_40 : i32
    %63 = arith.extui %62 : i1 to i32
    %c0_i32_41 = arith.constant 0 : i32
    %64 = arith.cmpi ne, %63, %c0_i32_41 : i32
    scf.if %64 {
      %c0_42 = arith.constant 0 : index
      %c0_43 = arith.constant 0 : index
      %c0_44 = arith.constant 0 : index
      %65 = vector.load %arg18[%c0_42, %c0_43, %c0_44] : memref<4x8x8xf32, #tpu.memory_space<vmem>>, vector<4x8x8xf32>
      %c0_45 = arith.constant 0 : index
      %c0_46 = arith.constant 0 : index
      %c0_47 = arith.constant 0 : index
      %66 = vector.load %arg17[%c0_45, %c0_46, %c0_47] : memref<4x8x1xf32, #tpu.memory_space<vmem>>, vector<4x8x1xf32>
      %67 = tpu.reciprocal %66 {approx = true} : vector<4x8x1xf32> -> vector<4x8x1xf32>
      %68 = vector.broadcast %67 : vector<4x8x1xf32> to vector<4x8x8xf32>
      %69 = arith.mulf %65, %68 : vector<4x8x8xf32>
      %70 = vector.extract_strided_slice %69 {offsets = [0, 0, 0], sizes = [1, 8, 8], strides = [1, 1, 1]} : vector<4x8x8xf32> to vector<1x8x8xf32>
      %71 = vector.shape_cast %70 : vector<1x8x8xf32> to vector<8x8xf32>
      %72 = vector.extract_strided_slice %69 {offsets = [1, 0, 0], sizes = [1, 8, 8], strides = [1, 1, 1]} : vector<4x8x8xf32> to vector<1x8x8xf32>
      %73 = vector.shape_cast %72 : vector<1x8x8xf32> to vector<8x8xf32>
      %74 = vector.extract_strided_slice %69 {offsets = [2, 0, 0], sizes = [1, 8, 8], strides = [1, 1, 1]} : vector<4x8x8xf32> to vector<1x8x8xf32>
      %75 = vector.shape_cast %74 : vector<1x8x8xf32> to vector<8x8xf32>
      %76 = vector.extract_strided_slice %69 {offsets = [3, 0, 0], sizes = [1, 8, 8], strides = [1, 1, 1]} : vector<4x8x8xf32> to vector<1x8x8xf32>
      %77 = vector.shape_cast %76 : vector<1x8x8xf32> to vector<8x8xf32>
      %78 = tpu.concatenate %71, %73, %75, %77 in 1 : vector<8x8xf32>, vector<8x8xf32>, vector<8x8xf32>, vector<8x8xf32> -> vector<8x32xf32>
      %79 = arith.truncf %78 : vector<8x32xf32> to vector<8x32xbf16>
      %c0_48 = arith.constant 0 : index
      %c0_49 = arith.constant 0 : index
      %80 = vector.load %arg12[%c0_48, %c0_49] : memref<32x32xbf16, #tpu.memory_space<vmem>>, vector<32x32xbf16>
      %cst_50 = arith.constant dense<0.000000e+00> : vector<8x32xf32>
      %81 = tpu.matmul %79, %80, %cst_50 {dimension_numbers = #tpu.dot_dimension_numbers<[1], [0], [0], [1], [0, 0, 1, 1], [], []>} : vector<8x32xbf16>, vector<32x32xbf16>, vector<8x32xf32> -> vector<8x32xf32>
      %c0_51 = arith.constant 0 : index
      %c0_52 = arith.constant 0 : index
      %82 = vector.load %arg13[%c0_51, %c0_52] : memref<1x32xf32, #tpu.memory_space<vmem>>, vector<1x32xf32>
      %83 = vector.broadcast %82 : vector<1x32xf32> to vector<8x32xf32>
      %84 = arith.addf %81, %83 : vector<8x32xf32>
      %c0_53 = arith.constant 0 : index
      %c0_54 = arith.constant 0 : index
      %c0_55 = arith.constant 0 : index
      %85 = vector.load %arg14[%c0_53, %c0_54, %c0_55] : memref<1x8x32xf32, #tpu.memory_space<vmem>>, vector<1x8x32xf32>
      %86 = vector.shape_cast %85 : vector<1x8x32xf32> to vector<8x32xf32>
      %87 = vector.shape_cast %84 : vector<8x32xf32> to vector<1x8x32xf32>
      tpu.vector_store %arg14[%c0_53, %c0_54, %c0_55], %87 {strides = array<i32>} : memref<1x8x32xf32, #tpu.memory_space<vmem>>, vector<1x8x32xf32>,
    } else {
    }
    return
  }
  func.func @transform_0(%arg0: i32, %arg1: i32, %arg2: i32) -> (i32, i32, i32) {
    %c0_i32 = arith.constant 0 : i32
    %c0_i32_0 = arith.constant 0 : i32
    return %arg0, %arg1, %c0_i32 : i32, i32, i32
  }
  func.func @transform_1(%arg0: i32, %arg1: i32, %arg2: i32) -> (i32, i32, i32) {
    %c0_i32 = arith.constant 0 : i32
    %c0_i32_0 = arith.constant 0 : i32
    return %arg0, %arg2, %c0_i32 : i32, i32, i32
  }
  func.func @transform_2(%arg0: i32, %arg1: i32, %arg2: i32) -> (i32, i32, i32) {
    %c0_i32 = arith.constant 0 : i32
    %c0_i32_0 = arith.constant 0 : i32
    return %arg0, %arg2, %c0_i32 : i32, i32, i32
  }
  func.func @transform_3(%arg0: i32, %arg1: i32, %arg2: i32) -> (i32, i32) {
    %c0_i32 = arith.constant 0 : i32
    %c0_i32_0 = arith.constant 0 : i32
    %c0_i32_1 = arith.constant 0 : i32
    return %c0_i32, %c0_i32_0 : i32, i32
  }
  func.func @transform_4(%arg0: i32, %arg1: i32, %arg2: i32) -> (i32, i32) {
    %c0_i32 = arith.constant 0 : i32
    %c0_i32_0 = arith.constant 0 : i32
    %c0_i32_1 = arith.constant 0 : i32
    return %c0_i32, %c0_i32_0 : i32, i32
  }
  func.func @transform_5(%arg0: i32, %arg1: i32, %arg2: i32) -> (i32, i32) {
    %c0_i32 = arith.constant 0 : i32
    %c0_i32_0 = arith.constant 0 : i32
    %c0_i32_1 = arith.constant 0 : i32
    return %c0_i32, %c0_i32_0 : i32, i32
  }
  func.func @transform_6(%arg0: i32, %arg1: i32, %arg2: i32) -> (i32, i32) {
    %c0_i32 = arith.constant 0 : i32
    %c0_i32_0 = arith.constant 0 : i32
    %c0_i32_1 = arith.constant 0 : i32
    return %c0_i32, %c0_i32_0 : i32, i32
  }
  func.func @transform_7(%arg0: i32, %arg1: i32, %arg2: i32) -> (i32, i32) {
    %c0_i32 = arith.constant 0 : i32
    %c0_i32_0 = arith.constant 0 : i32
    %c0_i32_1 = arith.constant 0 : i32
    return %c0_i32, %c0_i32_0 : i32, i32
  }
  func.func @transform_8(%arg0: i32, %arg1: i32, %arg2: i32) -> (i32, i32) {
    %c0_i32 = arith.constant 0 : i32
    %c0_i32_0 = arith.constant 0 : i32
    %c0_i32_1 = arith.constant 0 : i32
    return %c0_i32, %c0_i32_0 : i32, i32
  }
  func.func @transform_9(%arg0: i32, %arg1: i32, %arg2: i32) -> (i32, i32) {
    %c0_i32 = arith.constant 0 : i32
    %c0_i32_0 = arith.constant 0 : i32
    %c0_i32_1 = arith.constant 0 : i32
    return %c0_i32, %c0_i32_0 : i32, i32
  }
  func.func @transform_10(%arg0: i32, %arg1: i32, %arg2: i32) -> (i32, i32) {
    %c0_i32 = arith.constant 0 : i32
    %c0_i32_0 = arith.constant 0 : i32
    %c0_i32_1 = arith.constant 0 : i32
    return %c0_i32, %c0_i32_0 : i32, i32
  }
  func.func @transform_11(%arg0: i32, %arg1: i32, %arg2: i32) -> (i32, i32, i32) {
    %c0_i32 = arith.constant 0 : i32
    %c0_i32_0 = arith.constant 0 : i32
    return %arg0, %arg1, %c0_i32 : i32, i32, i32
  }
}

</mosaic_0001>

<llo_original>
// kernel: tpu_custom_call.1
$region0: #{tpu_custom_call.1}
  #allocation0 [shape = 'u32[]', space=smem, size = 0x4, offset = 0x4, fixed_abs, tag = 'smem constant byte address 0x4 - core index']
  #allocation1 [shape = 'u32[144,128]{1,0:T(1,128)}', space=vmem, size = 0x12000, scoped, tag = 'internal scratch']
  #allocation2 [shape = 'bf16[4,8,8]{2,1,0:T(8,128)(2,1)}', space=vmem, size = 0x2000, scoped, tag = 'scratch operand']
  #allocation3 [shape = 'f32[4,8,1]{2,1,0:T(8,128)}', space=vmem, size = 0x4000, scoped, tag = 'scratch operand']
  #allocation4 [shape = 'f32[4,8,1]{2,1,0:T(8,128)}', space=vmem, size = 0x4000, scoped, tag = 'scratch operand']
  #allocation5 [shape = 'f32[4,8,8]{2,1,0:T(8,128)}', space=vmem, size = 0x4000, scoped, tag = 'scratch operand']
  %s0 = inlined_call_operand.hbm [shape: bf16[2,8,16], index: 0, kind: input, shape index: {}]
  %s1 = inlined_call_operand.hbm [shape: bf16[2,16,16], index: 1, kind: input, shape index: {}]
  %s2 = inlined_call_operand.hbm [shape: bf16[2,16,16], index: 2, kind: input, shape index: {}]
  %s3 = inlined_call_operand.hbm [shape: bf16[16,32], index: 3, kind: input, shape index: {}]
  %s4 = inlined_call_operand.hbm [shape: f32[1,32], index: 4, kind: input, shape index: {}]
  %s5 = inlined_call_operand.hbm [shape: bf16[16,32], index: 5, kind: input, shape index: {}]
  %s6 = inlined_call_operand.hbm [shape: f32[1,32], index: 6, kind: input, shape index: {}]
  %s7 = inlined_call_operand.hbm [shape: bf16[16,32], index: 7, kind: input, shape index: {}]
  %s8 = inlined_call_operand.hbm [shape: f32[1,32], index: 8, kind: input, shape index: {}]
  %s9 = inlined_call_operand.vmem [shape: bf16[32,32], index: 9, kind: input, shape index: {}]
  %s10 = inlined_call_operand.vmem [shape: f32[1,32], index: 10, kind: input, shape index: {}]
  %s11 = inlined_call_operand.hbm [shape: f32[2,8,32], index: 11, kind: output, shape index: {}]
  %s12 = sld [smem:[#allocation0]]
  $region121: #{tpu_custom_call.1} parent=0
    _
  %s14 = ssub.s32 1, %s12
  %s15 = scalar_select 0, %s14, %s12
  $region1: #{tpu_custom_call.1} parent=0
    #allocation6 [shape = 'u8[4096]{0}', space=vmem, size = 0x1000, scoped, tag = 'input window, operand 0']
    #allocation7 [shape = 's32[2]{0}', space=sflag, size = 0x8, scoped, tag = 'scoped memory for tpu_custom_call.1']
    #allocation8 [shape = 's32[2]{0}', space=sflag, size = 0x8, scoped, tag = 'scoped memory for tpu_custom_call.1']
    #allocation9 [shape = 'u8[8192]{0}', space=vmem, size = 0x2000, scoped, tag = 'input window, operand 1']
    #allocation10 [shape = 's32[2]{0}', space=sflag, size = 0x8, scoped, tag = 'scoped memory for tpu_custom_call.1']
    #allocation11 [shape = 'u8[8192]{0}', space=vmem, size = 0x2000, scoped, tag = 'input window, operand 2']
    #allocation12 [shape = 'u8[4096]{0}', space=vmem, size = 0x1000, scoped, tag = 'input window, operand 3, single buffered']
    #allocation13 [shape = 's32[1]{0}', space=sflag, size = 0x4, scoped, tag = 'scoped memory for tpu_custom_call.1']
    #allocation14 [shape = 'u8[512]{0}', space=vmem, size = 0x400, scoped, tag = 'input window, operand 4, single buffered']
    #allocation15 [shape = 'u8[4096]{0}', space=vmem, size = 0x1000, scoped, tag = 'input window, operand 5, single buffered']
    #allocation16 [shape = 's32[1]{0}', space=sflag, size = 0x4, scoped, tag = 'scoped memory for tpu_custom_call.1']
    #allocation17 [shape = 'u8[512]{0}', space=vmem, size = 0x400, scoped, tag = 'input window, operand 6, single buffered']
    #allocation18 [shape = 'u8[4096]{0}', space=vmem, size = 0x1000, scoped, tag = 'input window, operand 7, single buffered']
    #allocation19 [shape = 's32[1]{0}', space=sflag, size = 0x4, scoped, tag = 'scoped memory for tpu_custom_call.1']
    #allocation20 [shape = 'u8[512]{0}', space=vmem, size = 0x400, scoped, tag = 'input window, operand 8, single buffered']
    #allocation21 [shape = 'u8[8192]{0}', space=vmem, size = 0x2000, scoped, tag = 'output window, operand 0']
    %16 = vsyncpa [#allocation7], 0
    %s17 = scalar_lea.sflag [#allocation7], 1
    %18 = vsyncpa %s17, 0
    %19 = vsyncpa [#allocation10], 0
    %s20 = scalar_lea.sflag [#allocation10], 1
    %21 = vsyncpa %s20, 0
    %22 = vsyncpa [#allocation13], 0
    %23 = vsyncpa [#allocation16], 0
    %24 = vsyncpa [#allocation19], 0
    %25 = vsyncpa [#allocation8], 0
    %s26 = scalar_lea.sflag [#allocation8], 1
    %27 = vsyncpa %s26, 0
    loop: start=0, step=1, limit=4
    $region2: #{tpu_custom_call.1} parent=1 // loop_pre_header
      _
    $region3: #{tpu_custom_call.1} parent=1 // loop_header
      %s29 = sphi 0, %s33
      %p30 = scmp.ge.s32.totalorder %s29, 4
      %s36 = sphi 0, %s55
      %s37 = sphi 0, %s51
      %s38 = sphi 0, %s47
      %s39 = sphi 0, %s36
      %s40 = sphi 0, %s37
      %s41 = sphi 0, %s38
      %s42 = sphi 0, %s39
      %s43 = sphi 0, %s40
      %s44 = sphi 0, %s41
      %s60 = sphi 0, %s62
      %s63 = sphi 0, %s60
      %s64 = sphi 0, %s63
      %s80 = sphi 0, %s64
      %s88 = sphi 0, %s90
      %s91 = sphi 0, %s88
      %s92 = sphi 0, %s91
      %s108 = sphi 0, %s92
      %s116 = sphi 0, %s118
      %s119 = sphi 0, %s116
      %s120 = sphi 0, %s119
      %s136 = sphi 0, %s120
      %s140 = sphi 0, %s140
      %s142 = sphi 0, %s140
      %s143 = sphi 0, %s142
      %s157 = sphi 0, %s143
      %s161 = sphi 0, %s161
      %s163 = sphi 0, %s161
      %s164 = sphi 0, %s163
      %s178 = sphi 0, %s164
      %s182 = sphi 0, %s182
      %s184 = sphi 0, %s182
      %s185 = sphi 0, %s184
      %s199 = sphi 0, %s185
      %s203 = sphi 0, %s203
      %s205 = sphi 0, %s203
      %s206 = sphi 0, %s205
      %s220 = sphi 0, %s206
      %s224 = sphi 0, %s224
      %s226 = sphi 0, %s224
      %s227 = sphi 0, %s226
      %s241 = sphi 0, %s227
      %s245 = sphi 0, %s245
      %s247 = sphi 0, %s245
      %s248 = sphi 0, %s247
      %s262 = sphi 0, %s248
      %s266 = sphi 0, %s266
      %s268 = sphi 0, %s266
      %s269 = sphi 0, %s268
      %s283 = sphi 0, %s269
      %s287 = sphi 0, %s287
      %s289 = sphi 0, %s287
      %s290 = sphi 0, %s289
      %s304 = sphi 0, %s290
      %s312 = sphi 0, %s314
      %s315 = sphi 0, %s312
      %s316 = sphi 0, %s315
      %s332 = sphi 0, %s316
    $region4: #{tpu_custom_call.1} parent=1 // loop_header_branch
      %32 = sbr.rel (%p30) target = $region8
    $region5: #{tpu_custom_call.1} parent=1 // loop_body
      %s34 = ssub.s32 %s29, 1
      %s35 = ssub.s32 %s29, 2
      %s45 = sadd.s32 1, %s38
      %p46 = scmp.ge.s32.totalorder %s45, 1
      %s47 = scalar_select %p46, 0, %s45
      %s48 = sadd.s32 1, %s37
      %s49 = scalar_select %p46, %s48, %s37
      %p50 = scmp.ge.s32.totalorder %s49, 1
      %s51 = scalar_select %p50, 0, %s49
      %s52 = sadd.s32 1, %s36
      %s53 = scalar_select %p50, %s52, %s36
      %p54 = scmp.ge.s32.totalorder %s53, 2
      %s55 = scalar_select %p54, 0, %s53
      %s56 = ssub.s32 %s36, %s55
      %s57 = ssub.s32 %s37, %s51
      %s58 = sor.u32 %s56, %s57
      %p59 = scmp.eq.s32.totalorder %s58, 0
      %s61 = sadd.s32 %s60, 1
      %s62 = scalar_select %p59, %s60, %s61
      %p65 = pneg %p59
      %p66 = scmp.eq.s32.totalorder %s29, 1
      %p67 = por %p65, %p66
      %p68 = scmp.ne.s32.totalorder %s60, %s63
      %p69 = scmp.eq.s32.totalorder %s29, 0
      %p70 = por %p68, %p69
      %p71 = scmp.ne.s32.totalorder %s60, %s63
      %p72 = scmp.eq.s32.totalorder %s34, 1
      %p73 = por %p71, %p72
      %p74 = scmp.ne.s32.totalorder %s63, %s64
      %p75 = scmp.eq.s32.totalorder %s34, 0
      %p76 = por %p74, %p75
      %p77 = scmp.ne.s32.totalorder %s63, %s64
      %p78 = scmp.eq.s32.totalorder %s35, 1
      %p79 = por %p77, %p78
      %p81 = scmp.ne.s32.totalorder %s64, %s80
      %p82 = scmp.eq.s32.totalorder %s35, 0
      %p83 = por %p81, %p82
      %s84 = ssub.s32 %s36, %s55
      %s85 = ssub.s32 %s38, %s47
      %s86 = sor.u32 %s84, %s85
      %p87 = scmp.eq.s32.totalorder %s86, 0
      %s89 = sadd.s32 %s88, 1
      %s90 = scalar_select %p87, %s88, %s89
      %p93 = pneg %p87
      %p94 = scmp.eq.s32.totalorder %s29, 1
      %p95 = por %p93, %p94
      %p96 = scmp.ne.s32.totalorder %s88, %s91
      %p97 = scmp.eq.s32.totalorder %s29, 0
      %p98 = por %p96, %p97
      %p99 = scmp.ne.s32.totalorder %s88, %s91
      %p100 = scmp.eq.s32.totalorder %s34, 1
      %p101 = por %p99, %p100
      %p102 = scmp.ne.s32.totalorder %s91, %s92
      %p103 = scmp.eq.s32.totalorder %s34, 0
      %p104 = por %p102, %p103
      %p105 = scmp.ne.s32.totalorder %s91, %s92
      %p106 = scmp.eq.s32.totalorder %s35, 1
      %p107 = por %p105, %p106
      %p109 = scmp.ne.s32.totalorder %s92, %s108
      %p110 = scmp.eq.s32.totalorder %s35, 0
      %p111 = por %p109, %p110
      %s112 = ssub.s32 %s36, %s55
      %s113 = ssub.s32 %s38, %s47
      %s114 = sor.u32 %s112, %s113
      %p115 = scmp.eq.s32.totalorder %s114, 0
      %s117 = sadd.s32 %s116, 1
      %s118 = scalar_select %p115, %s116, %s117
      %p121 = pneg %p115
      %p122 = scmp.eq.s32.totalorder %s29, 1
      %p123 = por %p121, %p122
      %p124 = scmp.ne.s32.totalorder %s116, %s119
      %p125 = scmp.eq.s32.totalorder %s29, 0
      %p126 = por %p124, %p125
      %p127 = scmp.ne.s32.totalorder %s116, %s119
      %p128 = scmp.eq.s32.totalorder %s34, 1
      %p129 = por %p127, %p128
      %p130 = scmp.ne.s32.totalorder %s119, %s120
      %p131 = scmp.eq.s32.totalorder %s34, 0
      %p132 = por %p130, %p131
      %p133 = scmp.ne.s32.totalorder %s119, %s120
      %p134 = scmp.eq.s32.totalorder %s35, 1
      %p135 = por %p133, %p134
      %p137 = scmp.ne.s32.totalorder %s120, %s136
      %p138 = scmp.eq.s32.totalorder %s35, 0
      %p139 = por %p137, %p138
      %s141 = sadd.s32 %s140, 1
      %p144 = scmp.eq.s32.totalorder %s29, 1
      %p145 = scmp.ne.s32.totalorder %s140, %s142
      %p146 = scmp.eq.s32.totalorder %s29, 0
      %p147 = por %p145, %p146
      %p148 = scmp.ne.s32.totalorder %s140, %s142
      %p149 = scmp.eq.s32.totalorder %s34, 1
      %p150 = por %p148, %p149
      %p151 = scmp.ne.s32.totalorder %s142, %s143
      %p152 = scmp.eq.s32.totalorder %s34, 0
      %p153 = por %p151, %p152
      %p154 = scmp.ne.s32.totalorder %s142, %s143
      %p155 = scmp.eq.s32.totalorder %s35, 1
      %p156 = por %p154, %p155
      %p158 = scmp.ne.s32.totalorder %s143, %s157
      %p159 = scmp.eq.s32.totalorder %s35, 0
      %p160 = por %p158, %p159
      %s162 = sadd.s32 %s161, 1
      %p165 = scmp.eq.s32.totalorder %s29, 1
      %p166 = scmp.ne.s32.totalorder %s161, %s163
      %p167 = scmp.eq.s32.totalorder %s29, 0
      %p168 = por %p166, %p167
      %p169 = scmp.ne.s32.totalorder %s161, %s163
      %p170 = scmp.eq.s32.totalorder %s34, 1
      %p171 = por %p169, %p170
      %p172 = scmp.ne.s32.totalorder %s163, %s164
      %p173 = scmp.eq.s32.totalorder %s34, 0
      %p174 = por %p172, %p173
      %p175 = scmp.ne.s32.totalorder %s163, %s164
      %p176 = scmp.eq.s32.totalorder %s35, 1
      %p177 = por %p175, %p176
      %p179 = scmp.ne.s32.totalorder %s164, %s178
      %p180 = scmp.eq.s32.totalorder %s35, 0
      %p181 = por %p179, %p180
      %s183 = sadd.s32 %s182, 1
      %p186 = scmp.eq.s32.totalorder %s29, 1
      %p187 = scmp.ne.s32.totalorder %s182, %s184
      %p188 = scmp.eq.s32.totalorder %s29, 0
      %p189 = por %p187, %p188
      %p190 = scmp.ne.s32.totalorder %s182, %s184
      %p191 = scmp.eq.s32.totalorder %s34, 1
      %p192 = por %p190, %p191
      %p193 = scmp.ne.s32.totalorder %s184, %s185
      %p194 = scmp.eq.s32.totalorder %s34, 0
      %p195 = por %p193, %p194
      %p196 = scmp.ne.s32.totalorder %s184, %s185
      %p197 = scmp.eq.s32.totalorder %s35, 1
      %p198 = por %p196, %p197
      %p200 = scmp.ne.s32.totalorder %s185, %s199
      %p201 = scmp.eq.s32.totalorder %s35, 0
      %p202 = por %p200, %p201
      %s204 = sadd.s32 %s203, 1
      %p207 = scmp.eq.s32.totalorder %s29, 1
      %p208 = scmp.ne.s32.totalorder %s203, %s205
      %p209 = scmp.eq.s32.totalorder %s29, 0
      %p210 = por %p208, %p209
      %p211 = scmp.ne.s32.totalorder %s203, %s205
      %p212 = scmp.eq.s32.totalorder %s34, 1
      %p213 = por %p211, %p212
      %p214 = scmp.ne.s32.totalorder %s205, %s206
      %p215 = scmp.eq.s32.totalorder %s34, 0
      %p216 = por %p214, %p215
      %p217 = scmp.ne.s32.totalorder %s205, %s206
      %p218 = scmp.eq.s32.totalorder %s35, 1
      %p219 = por %p217, %p218
      %p221 = scmp.ne.s32.totalorder %s206, %s220
      %p222 = scmp.eq.s32.totalorder %s35, 0
      %p223 = por %p221, %p222
      %s225 = sadd.s32 %s224, 1
      %p228 = scmp.eq.s32.totalorder %s29, 1
      %p229 = scmp.ne.s32.totalorder %s224, %s226
      %p230 = scmp.eq.s32.totalorder %s29, 0
      %p231 = por %p229, %p230
      %p232 = scmp.ne.s32.totalorder %s224, %s226
      %p233 = scmp.eq.s32.totalorder %s34, 1
      %p234 = por %p232, %p233
      %p235 = scmp.ne.s32.totalorder %s226, %s227
      %p236 = scmp.eq.s32.totalorder %s34, 0
      %p237 = por %p235, %p236
      %p238 = scmp.ne.s32.totalorder %s226, %s227
      %p239 = scmp.eq.s32.totalorder %s35, 1
      %p240 = por %p238, %p239
      %p242 = scmp.ne.s32.totalorder %s227, %s241
      %p243 = scmp.eq.s32.totalorder %s35, 0
      %p244 = por %p242, %p243
      %s246 = sadd.s32 %s245, 1
      %p249 = scmp.eq.s32.totalorder %s29, 1
      %p250 = scmp.ne.s32.totalorder %s245, %s247
      %p251 = scmp.eq.s32.totalorder %s29, 0
      %p252 = por %p250, %p251
      %p253 = scmp.ne.s32.totalorder %s245, %s247
      %p254 = scmp.eq.s32.totalorder %s34, 1
      %p255 = por %p253, %p254
      %p256 = scmp.ne.s32.totalorder %s247, %s248
      %p257 = scmp.eq.s32.totalorder %s34, 0
      %p258 = por %p256, %p257
      %p259 = scmp.ne.s32.totalorder %s247, %s248
      %p260 = scmp.eq.s32.totalorder %s35, 1
      %p261 = por %p259, %p260
      %p263 = scmp.ne.s32.totalorder %s248, %s262
      %p264 = scmp.eq.s32.totalorder %s35, 0
      %p265 = por %p263, %p264
      %s267 = sadd.s32 %s266, 1
      %p270 = scmp.eq.s32.totalorder %s29, 1
      %p271 = scmp.ne.s32.totalorder %s266, %s268
      %p272 = scmp.eq.s32.totalorder %s29, 0
      %p273 = por %p271, %p272
      %p274 = scmp.ne.s32.totalorder %s266, %s268
      %p275 = scmp.eq.s32.totalorder %s34, 1
      %p276 = por %p274, %p275
      %p277 = scmp.ne.s32.totalorder %s268, %s269
      %p278 = scmp.eq.s32.totalorder %s34, 0
      %p279 = por %p277, %p278
      %p280 = scmp.ne.s32.totalorder %s268, %s269
      %p281 = scmp.eq.s32.totalorder %s35, 1
      %p282 = por %p280, %p281
      %p284 = scmp.ne.s32.totalorder %s269, %s283
      %p285 = scmp.eq.s32.totalorder %s35, 0
      %p286 = por %p284, %p285
      %s288 = sadd.s32 %s287, 1
      %p291 = scmp.eq.s32.totalorder %s29, 1
      %p292 = scmp.ne.s32.totalorder %s287, %s289
      %p293 = scmp.eq.s32.totalorder %s29, 0
      %p294 = por %p292, %p293
      %p295 = scmp.ne.s32.totalorder %s287, %s289
      %p296 = scmp.eq.s32.totalorder %s34, 1
      %p297 = por %p295, %p296
      %p298 = scmp.ne.s32.totalorder %s289, %s290
      %p299 = scmp.eq.s32.totalorder %s34, 0
      %p300 = por %p298, %p299
      %p301 = scmp.ne.s32.totalorder %s289, %s290
      %p302 = scmp.eq.s32.totalorder %s35, 1
      %p303 = por %p301, %p302
      %p305 = scmp.ne.s32.totalorder %s290, %s304
      %p306 = scmp.eq.s32.totalorder %s35, 0
      %p307 = por %p305, %p306
      %s308 = ssub.s32 %s36, %s55
      %s309 = ssub.s32 %s37, %s51
      %s310 = sor.u32 %s308, %s309
      %p311 = scmp.eq.s32.totalorder %s310, 0
      %s313 = sadd.s32 %s312, 1
      %s314 = scalar_select %p311, %s312, %s313
      %p317 = pneg %p311
      %p318 = scmp.eq.s32.totalorder %s29, 1
      %p319 = por %p317, %p318
      %p320 = scmp.ne.s32.totalorder %s312, %s315
      %p321 = scmp.eq.s32.totalorder %s29, 0
      %p322 = por %p320, %p321
      %p323 = scmp.ne.s32.totalorder %s312, %s315
      %p324 = scmp.eq.s32.totalorder %s34, 1
      %p325 = por %p323, %p324
      %p326 = scmp.ne.s32.totalorder %s315, %s316
      %p327 = scmp.eq.s32.totalorder %s34, 0
      %p328 = por %p326, %p327
      %p329 = scmp.ne.s32.totalorder %s315, %s316
      %p330 = scmp.eq.s32.totalorder %s35, 1
      %p331 = por %p329, %p330
      %p333 = scmp.ne.s32.totalorder %s316, %s332
      %p334 = scmp.eq.s32.totalorder %s35, 0
      %p335 = por %p333, %p334
      %p336 = scmp.le.s32.totalorder 1, %s29
      %p337 = scmp.lt.s32.totalorder %s29, 3
      %p338 = pnand %p336, %p337
      %p339 = pneg %p338
      // Predicated region
      $region9: #{tpu_custom_call.1} parent=5 // pred_check
        _
      $region10: #{tpu_custom_call.1} parent=5 // pred_check_branch
        %341 = sbr.rel (%p338) target = $region12
      $region11: #{tpu_custom_call.1} parent=5 // pred_region
        %s342 = ssub.s32 %s29, 1
        // Predicated region
        $region13: #{tpu_custom_call.1} parent=11 // pred_check
          %p343 = pneg %p153
        $region14: #{tpu_custom_call.1} parent=11 // pred_check_branch
          %345 = sbr.rel (%p343) target = $region16
        $region15: #{tpu_custom_call.1} parent=11 // pred_region
          %s347 = ssub.s32 128, 128
          %348 = vsyncadd [#allocation13], %s347
          %s349 = sshll.u32 [#allocation12], 4
          %s350 = int_to_ptr.vmem [resolvable:$true] %s349
          %355 = dma.hbm_to_vmem [thread:$0]  %s3, 128, %s350, [#allocation13], 64, 64, 4
        $region16: #{tpu_custom_call.1} parent=11 // pred_fallthru
          _
        // Predicated region
        $region17: #{tpu_custom_call.1} parent=11 // pred_check
          %p356 = pneg %p174
        $region18: #{tpu_custom_call.1} parent=11 // pred_check_branch
          %358 = sbr.rel (%p356) target = $region20
        $region19: #{tpu_custom_call.1} parent=11 // pred_region
          %s360 = ssub.s32 16, 16
          %361 = vsyncadd [#allocation13], %s360
          %s363 = sshll.u32 [#allocation14], 4
          %s364 = int_to_ptr.vmem [resolvable:$true] %s363
          %366 = dma.hbm_to_vmem [thread:$0]  %s4, 16, %s364, [#allocation13]
        $region20: #{tpu_custom_call.1} parent=11 // pred_fallthru
          _
        // Predicated region
        $region21: #{tpu_custom_call.1} parent=11 // pred_check
          %p367 = pneg %p195
        $region22: #{tpu_custom_call.1} parent=11 // pred_check_branch
          %369 = sbr.rel (%p367) target = $region24
        $region23: #{tpu_custom_call.1} parent=11 // pred_region
          %s371 = ssub.s32 128, 128
          %372 = vsyncadd [#allocation16], %s371
          %s373 = sshll.u32 [#allocation15], 4
          %s374 = int_to_ptr.vmem [resolvable:$true] %s373
          %379 = dma.hbm_to_vmem [thread:$0]  %s5, 128, %s374, [#allocation16], 64, 64, 4
        $region24: #{tpu_custom_call.1} parent=11 // pred_fallthru
          _
        // Predicated region
        $region25: #{tpu_custom_call.1} parent=11 // pred_check
          %p380 = pneg %p216
        $region26: #{tpu_custom_call.1} parent=11 // pred_check_branch
          %382 = sbr.rel (%p380) target = $region28
        $region27: #{tpu_custom_call.1} parent=11 // pred_region
          %s384 = ssub.s32 16, 16
          %385 = vsyncadd [#allocation16], %s384
          %s387 = sshll.u32 [#allocation17], 4
          %s388 = int_to_ptr.vmem [resolvable:$true] %s387
          %390 = dma.hbm_to_vmem [thread:$0]  %s6, 16, %s388, [#allocation16]
        $region28: #{tpu_custom_call.1} parent=11 // pred_fallthru
          _
        // Predicated region
        $region29: #{tpu_custom_call.1} parent=11 // pred_check
          %p391 = pneg %p237
        $region30: #{tpu_custom_call.1} parent=11 // pred_check_branch
          %393 = sbr.rel (%p391) target = $region32
        $region31: #{tpu_custom_call.1} parent=11 // pred_region
          %s395 = ssub.s32 128, 128
          %396 = vsyncadd [#allocation19], %s395
          %s397 = sshll.u32 [#allocation18], 4
          %s398 = int_to_ptr.vmem [resolvable:$true] %s397
          %403 = dma.hbm_to_vmem [thread:$0]  %s7, 128, %s398, [#allocation19], 64, 64, 4
        $region32: #{tpu_custom_call.1} parent=11 // pred_fallthru
          _
        // Predicated region
        $region33: #{tpu_custom_call.1} parent=11 // pred_check
          %p404 = pneg %p258
        $region34: #{tpu_custom_call.1} parent=11 // pred_check_branch
          %406 = sbr.rel (%p404) target = $region36
        $region35: #{tpu_custom_call.1} parent=11 // pred_region
          %s408 = ssub.s32 16, 16
          %409 = vsyncadd [#allocation19], %s408
          %s411 = sshll.u32 [#allocation20], 4
          %s412 = int_to_ptr.vmem [resolvable:$true] %s411
          %414 = dma.hbm_to_vmem [thread:$0]  %s8, 16, %s412, [#allocation19]
        $region36: #{tpu_custom_call.1} parent=11 // pred_fallthru
          _
        // Predicated region
        $region37: #{tpu_custom_call.1} parent=11 // pred_check
          %p415 = pneg %p279
        $region38: #{tpu_custom_call.1} parent=11 // pred_check_branch
          %417 = sbr.rel (%p415) target = $region40
        $region39: #{tpu_custom_call.1} parent=11 // pred_region
          _
        $region40: #{tpu_custom_call.1} parent=11 // pred_fallthru
          _
        // Predicated region
        $region41: #{tpu_custom_call.1} parent=11 // pred_check
          %p418 = pneg %p300
        $region42: #{tpu_custom_call.1} parent=11 // pred_check_branch
          %420 = sbr.rel (%p418) target = $region44
        $region43: #{tpu_custom_call.1} parent=11 // pred_region
          _
        $region44: #{tpu_custom_call.1} parent=11 // pred_fallthru
          _
      $region12: #{tpu_custom_call.1} parent=5 // pred_fallthru
        _
      %p421 = scmp.lt.s32.totalorder %s29, 2
      // Predicated region
      $region45: #{tpu_custom_call.1} parent=5 // pred_check
        %p422 = pneg %p421
      $region46: #{tpu_custom_call.1} parent=5 // pred_check_branch
        %424 = sbr.rel (%p422) target = $region48
      $region47: #{tpu_custom_call.1} parent=5 // pred_region
        // Predicated region
        $region49: #{tpu_custom_call.1} parent=47 // pred_check
          %p425 = pneg %p70
        $region50: #{tpu_custom_call.1} parent=47 // pred_check_branch
          %427 = sbr.rel (%p425) target = $region52
        $region51: #{tpu_custom_call.1} parent=47 // pred_region
          %s428 = sand.u32 %s60, 1
          %s429 = scalar_lea.sflag [#allocation7], %s428
          %s430 = sand.u32 %s60, 1
          %s431 = smul.addr %s430, 4
          %s432 = scalar_lea.vmem [#allocation6], %s431
          %s434 = ssub.s32 64, 64
          %435 = vsyncadd %s429, %s434
          %s436 = sadd.s32 %s37, %s36
          %s437 = smul.addr %s436, 64
          %s438 = scalar_lea.hbm %s0, %s437
          %s440 = sshll.u32 %s432, 4
          %s441 = int_to_ptr.vmem [resolvable:$true] %s440
          %443 = dma.hbm_to_vmem [thread:$0]  %s438, 64, %s441, %s429
        $region52: #{tpu_custom_call.1} parent=47 // pred_fallthru
          _
        // Predicated region
        $region53: #{tpu_custom_call.1} parent=47 // pred_check
          %p444 = pneg %p98
        $region54: #{tpu_custom_call.1} parent=47 // pred_check_branch
          %446 = sbr.rel (%p444) target = $region56
        $region55: #{tpu_custom_call.1} parent=47 // pred_region
          %s447 = sand.u32 %s29, 1
          %s448 = scalar_lea.sflag [#allocation10], %s447
          %s449 = sand.u32 %s88, 1
          %s450 = smul.addr %s449, 8
          %s451 = scalar_lea.vmem [#allocation9], %s450
          %s452 = smul.u32 2, %s38
          %s454 = ssub.s32 128, 128
          %455 = vsyncadd %s448, %s454
          %s456 = smul.addr %s36, 2
          %s457 = sadd.s32 %s452, %s456
          %s458 = smul.addr %s457, 64
          %s459 = scalar_lea.hbm %s1, %s458
          %s460 = sshll.u32 %s451, 4
          %s461 = int_to_ptr.vmem [resolvable:$true] %s460
          %466 = dma.hbm_to_vmem [thread:$0]  %s459, 128, %s461, %s448, 64, 64, 4
        $region56: #{tpu_custom_call.1} parent=47 // pred_fallthru
          _
        // Predicated region
        $region57: #{tpu_custom_call.1} parent=47 // pred_check
          %p467 = pneg %p126
        $region58: #{tpu_custom_call.1} parent=47 // pred_check_branch
          %469 = sbr.rel (%p467) target = $region60
        $region59: #{tpu_custom_call.1} parent=47 // pred_region
          %s470 = sand.u32 %s29, 1
          %s471 = scalar_lea.sflag [#allocation10], %s470
          %s472 = sand.u32 %s116, 1
          %s473 = smul.addr %s472, 8
          %s474 = scalar_lea.vmem [#allocation11], %s473
          %s475 = smul.u32 2, %s38
          %s477 = ssub.s32 128, 128
          %478 = vsyncadd %s471, %s477
          %s479 = smul.addr %s36, 2
          %s480 = sadd.s32 %s475, %s479
          %s481 = smul.addr %s480, 64
          %s482 = scalar_lea.hbm %s2, %s481
          %s483 = sshll.u32 %s474, 4
          %s484 = int_to_ptr.vmem [resolvable:$true] %s483
          %489 = dma.hbm_to_vmem [thread:$0]  %s482, 128, %s484, %s471, 64, 64, 4
        $region60: #{tpu_custom_call.1} parent=47 // pred_fallthru
          _
      $region48: #{tpu_custom_call.1} parent=5 // pred_fallthru
        _
      %p490 = scmp.le.s32.totalorder 1, %s29
      %p491 = scmp.lt.s32.totalorder %s29, 3
      %p492 = pnand %p490, %p491
      %p493 = pneg %p492
      // Predicated region
      $region61: #{tpu_custom_call.1} parent=5 // pred_check
        _
      $region62: #{tpu_custom_call.1} parent=5 // pred_check_branch
        %495 = sbr.rel (%p492) target = $region64
      $region63: #{tpu_custom_call.1} parent=5 // pred_region
        %s496 = ssub.s32 %s29, 1
        %s497 = sand.u32 %s63, 1
        %s498 = scalar_lea.sflag [#allocation7], %s497
        %s499 = sand.u32 %s63, 1
        %s500 = smul.addr %s499, 4
        %s501 = scalar_lea.vmem [#allocation6], %s500
        // Predicated region
        $region65: #{tpu_custom_call.1} parent=63 // pred_check
          %p502 = pneg %p76
        $region66: #{tpu_custom_call.1} parent=63 // pred_check_branch
          %504 = sbr.rel (%p502) target = $region68
        $region67: #{tpu_custom_call.1} parent=63 // pred_region
          %505 = dma.done %s498, 64
        $region68: #{tpu_custom_call.1} parent=63 // pred_fallthru
          _
        %s506 = sand.u32 %s34, 1
        %s507 = scalar_lea.sflag [#allocation10], %s506
        %s508 = sand.u32 %s91, 1
        %s509 = smul.addr %s508, 8
        %s510 = scalar_lea.vmem [#allocation9], %s509
        // Predicated region
        $region69: #{tpu_custom_call.1} parent=63 // pred_check
          %p511 = pneg %p104
        $region70: #{tpu_custom_call.1} parent=63 // pred_check_branch
          %513 = sbr.rel (%p511) target = $region72
        $region71: #{tpu_custom_call.1} parent=63 // pred_region
          %514 = dma.done %s507, 128
        $region72: #{tpu_custom_call.1} parent=63 // pred_fallthru
          _
        %s515 = sand.u32 %s34, 1
        %s516 = scalar_lea.sflag [#allocation10], %s515
        %s517 = sand.u32 %s119, 1
        %s518 = smul.addr %s517, 8
        %s519 = scalar_lea.vmem [#allocation11], %s518
        // Predicated region
        $region73: #{tpu_custom_call.1} parent=63 // pred_check
          %p520 = pneg %p132
        $region74: #{tpu_custom_call.1} parent=63 // pred_check_branch
          %522 = sbr.rel (%p520) target = $region76
        $region75: #{tpu_custom_call.1} parent=63 // pred_region
          %523 = dma.done %s516, 128
        $region76: #{tpu_custom_call.1} parent=63 // pred_fallthru
          _
        // Predicated region
        $region77: #{tpu_custom_call.1} parent=63 // pred_check
          %p524 = pneg %p153
        $region78: #{tpu_custom_call.1} parent=63 // pred_check_branch
          %526 = sbr.rel (%p524) target = $region80
        $region79: #{tpu_custom_call.1} parent=63 // pred_region
          %527 = dma.done [#allocation13], 128
        $region80: #{tpu_custom_call.1} parent=63 // pred_fallthru
          _
        // Predicated region
        $region81: #{tpu_custom_call.1} parent=63 // pred_check
          %p528 = pneg %p174
        $region82: #{tpu_custom_call.1} parent=63 // pred_check_branch
          %530 = sbr.rel (%p528) target = $region84
        $region83: #{tpu_custom_call.1} parent=63 // pred_region
          %531 = dma.done [#allocation13], 16
        $region84: #{tpu_custom_call.1} parent=63 // pred_fallthru
          _
        // Predicated region
        $region85: #{tpu_custom_call.1} parent=63 // pred_check
          %p532 = pneg %p195
        $region86: #{tpu_custom_call.1} parent=63 // pred_check_branch
          %534 = sbr.rel (%p532) target = $region88
        $region87: #{tpu_custom_call.1} parent=63 // pred_region
          %535 = dma.done [#allocation16], 128
        $region88: #{tpu_custom_call.1} parent=63 // pred_fallthru
          _
        // Predicated region
        $region89: #{tpu_custom_call.1} parent=63 // pred_check
          %p536 = pneg %p216
        $region90: #{tpu_custom_call.1} parent=63 // pred_check_branch
          %538 = sbr.rel (%p536) target = $region92
        $region91: #{tpu_custom_call.1} parent=63 // pred_region
          %539 = dma.done [#allocation16], 16
        $region92: #{tpu_custom_call.1} parent=63 // pred_fallthru
          _
        // Predicated region
        $region93: #{tpu_custom_call.1} parent=63 // pred_check
          %p540 = pneg %p237
        $region94: #{tpu_custom_call.1} parent=63 // pred_check_branch
          %542 = sbr.rel (%p540) target = $region96
        $region95: #{tpu_custom_call.1} parent=63 // pred_region
          %543 = dma.done [#allocation19], 128
        $region96: #{tpu_custom_call.1} parent=63 // pred_fallthru
          _
        // Predicated region
        $region97: #{tpu_custom_call.1} parent=63 // pred_check
          %p544 = pneg %p258
        $region98: #{tpu_custom_call.1} parent=63 // pred_check_branch
          %546 = sbr.rel (%p544) target = $region100
        $region99: #{tpu_custom_call.1} parent=63 // pred_region
          %547 = dma.done [#allocation19], 16
        $region100: #{tpu_custom_call.1} parent=63 // pred_fallthru
          _
        %s548 = sand.u32 %s63, 1
        %s549 = scalar_lea.sflag [#allocation7], %s548
        %s550 = sand.u32 %s63, 1
        %s551 = smul.addr %s550, 4
        %s552 = scalar_lea.vmem [#allocation6], %s551
        %p553 = pneg %p76
        %p554 = pneg %p73
        %s555 = sand.u32 %s34, 1
        %s556 = scalar_lea.sflag [#allocation10], %s555
        %s557 = sand.u32 %s91, 1
        %s558 = smul.addr %s557, 8
        %s559 = scalar_lea.vmem [#allocation9], %s558
        %p560 = pneg %p104
        %p561 = pneg %p101
        %s562 = sand.u32 %s34, 1
        %s563 = scalar_lea.sflag [#allocation10], %s562
        %s564 = sand.u32 %s119, 1
        %s565 = smul.addr %s564, 8
        %s566 = scalar_lea.vmem [#allocation11], %s565
        %p567 = pneg %p132
        %p568 = pneg %p129
        %p569 = pneg %p153
        %p570 = pneg %p150
        %p571 = pneg %p174
        %p572 = pneg %p171
        %p573 = pneg %p195
        %p574 = pneg %p192
        %p575 = pneg %p216
        %p576 = pneg %p213
        %p577 = pneg %p237
        %p578 = pneg %p234
        %p579 = pneg %p258
        %p580 = pneg %p255
        %p581 = pneg %p279
        %p582 = pneg %p276
        %p583 = pneg %p300
        %p584 = pneg %p297
        %p585 = pneg %p328
        %p586 = pneg %p325
        %s587 = sand.u32 %s315, 1
        %s588 = scalar_lea.sflag [#allocation8], %s587
        %s589 = sand.u32 %s315, 1
        %s590 = smul.addr %s589, 8
        %s591 = scalar_lea.vmem [#allocation21], %s590
        %s592 = smul.u32 2, %s41
        %s593 = smul.u32 2, %s41
        %p595 = scmp.eq.s32.totalorder %s41, 0
        // Predicated region
        $region101: #{tpu_custom_call.1} parent=63 // pred_check
          %p596 = pneg %p595
        $region102: #{tpu_custom_call.1} parent=63 // pred_check_branch
          %598 = sbr.rel (%p596) target = $region104
        $region103: #{tpu_custom_call.1} parent=63 // pred_region
          %v599 = vld [vmem:[%s501] sm:$0xf]
          %v600 = vld [vmem:[#allocation12] sm:$0xf]
          %v601 = vld [vmem:[#allocation12 + $0x4] sm:$0xf]
          %v602 = vld [vmem:[#allocation14] sm:$0x1]
          %v604 = vlaneseq
          %v605 = vshrl.u32 %v604, 7
          %v606 = vsub.s32 0, %v605
          %v607 = vrot.slane %v602, %v606
          %v611 = vunpack.c.l.b16 %v600
          %v612 = vunpack.c.l.b16 %v601
          %v613 = vpack.c.b16 %v612, %v611
          %vm615 = vcmask 130048
          %v617 = vsel %vm615, %v599, 0
          %619 = vmatprep.subr.bf16.mxu0 0
          %620 = vmatpush1.bf16.msra.mxu0 0
          %621 = vmatprep.subr.bf16.mxu0 0
          %622 = vmatpush1.bf16.msra.mxu0 0
          %623 = vmatprep.subr.bf16.mxu0 0
          %624 = vmatpush1.bf16.msra.mxu0 0
          %625 = vmatprep.subr.bf16.mxu0 0
          %626 = vmatpush1.bf16.msra.mxu0 0
          %627 = vmatprep.subr.bf16.mxu0 0
          %628 = vmatpush1.bf16.msra.mxu0 0
          %629 = vmatprep.subr.bf16.mxu0 0
          %630 = vmatpush1.bf16.msra.mxu0 0
          %631 = vmatprep.subr.bf16.mxu0 0
          %632 = vmatpush1.bf16.msra.mxu0 0
          %633 = vmatprep.subr.bf16.mxu0 0
          %634 = vmatpush1.bf16.msra.mxu0 %v613
          %635 = vmatprep.subr.bf16.mxu0 0
          %636 = vmatpush2.bf16.msra.mxu0 0
          %637 = vmatprep.subr.bf16.mxu0 0
          %638 = vmatpush2.bf16.msra.mxu0 0
          %639 = vmatprep.subr.bf16.mxu0 0
          %640 = vmatpush2.bf16.msra.mxu0 0
          %641 = vmatprep.subr.bf16.mxu0 0
          %642 = vmatpush2.bf16.msra.mxu0 0
          %643 = vmatprep.subr.bf16.mxu0 0
          %644 = vmatpush2.bf16.msra.mxu0 0
          %645 = vmatprep.subr.bf16.mxu0 0
          %646 = vmatpush2.bf16.msra.mxu0 0
          %647 = vmatprep.subr.bf16.mxu0 0
          %648 = vmatpush2.bf16.msra.mxu0 0
          %649 = vmatprep.subr.bf16.mxu0 0
          %650 = vmatpush2.bf16.msra.mxu0 0
          %651 = vmatprep.mubr.bf16.mxu0 0
          %652 = vmatmul.mubr.bf16.gmra.mxu0 %v617
          %v653 = vpop.f32.mrf.mxu0
          %v654 = vadd.f32 %v607, %v653
          %v655 = vpop.f32.mrf.mxu0
          %v656 = vpop.f32.mrf.mxu0
          %v657 = vpop.f32.mrf.mxu0
          %658 = vdwg.mxu0
          %v659 = vmul.f32 %v654, 0.35355338
          %661 = vrot.lane.b32.xlu0 %v659, 120
          %v662 = vpop.permute.xlu0 %661
          %664 = vrot.lane.b32.xlu0 %v659, 112
          %v665 = vpop.permute.xlu0 %664
          %667 = vrot.lane.b32.xlu0 %v659, 104
          %v668 = vpop.permute.xlu0 %667
          %v670 = vpack.c.bf16 %v659, %v659
          %v671 = vpack.c.bf16 %v662, %v662
          %v672 = vpack.c.bf16 %v665, %v665
          %v673 = vpack.c.bf16 %v668, %v668
          %vm674 = vcmask 60416
          %675 = vst.msk [vmem:[#allocation2] sm:$0xf] %vm674, %v670
          %676 = vst.msk [vmem:[#allocation2 + $0x4] sm:$0xf] %vm674, %v671
          %677 = vst.msk [vmem:[#allocation2 + $0x8] sm:$0xf] %vm674, %v672
          %678 = vst.msk [vmem:[#allocation2 + $0xc] sm:$0xf] %vm674, %v673
          %vm679 = vcmask 7168
          %680 = vst.msk [vmem:[#allocation3] sm:$0xff] %vm679, -inf
          %681 = vst.msk [vmem:[#allocation3 + $0x8] sm:$0xff] %vm679, -inf
          %682 = vst.msk [vmem:[#allocation3 + $0x10] sm:$0xff] %vm679, -inf
          %683 = vst.msk [vmem:[#allocation3 + $0x18] sm:$0xff] %vm679, -inf
          %684 = vst.msk [vmem:[#allocation4] sm:$0xff] %vm679, 0.0
          %685 = vst.msk [vmem:[#allocation4 + $0x8] sm:$0xff] %vm679, 0.0
          %686 = vst.msk [vmem:[#allocation4 + $0x10] sm:$0xff] %vm679, 0.0
          %687 = vst.msk [vmem:[#allocation4 + $0x18] sm:$0xff] %vm679, 0.0
          %vm688 = vcmask 64512
          %689 = vst.msk [vmem:[#allocation5] sm:$0xff] %vm688, 0.0
          %690 = vst.msk [vmem:[#allocation5 + $0x8] sm:$0xff] %vm688, 0.0
          %691 = vst.msk [vmem:[#allocation5 + $0x10] sm:$0xff] %vm688, 0.0
          %692 = vst.msk [vmem:[#allocation5 + $0x18] sm:$0xff] %vm688, 0.0
        $region104: #{tpu_custom_call.1} parent=63 // pred_fallthru
          _
        %v693 = vld [vmem:[%s510] sm:$0xf]
        %v694 = vld [vmem:[%s510 + $0x4] sm:$0xf]
        %v695 = vld [vmem:[#allocation15] sm:$0xf]
        %v696 = vld [vmem:[#allocation15 + $0x4] sm:$0xf]
        %v697 = vld [vmem:[#allocation17] sm:$0x1]
        %v699 = vlaneseq
        %v700 = vshrl.u32 %v699, 7
        %v701 = vsub.s32 0, %v700
        %v702 = vrot.slane %v697, %v701
        %v706 = vunpack.c.l.b16 %v693
        %v707 = vunpack.c.l.b16 %v694
        %v708 = vpack.c.b16 %v707, %v706
        %v711 = vunpack.c.l.b16 %v695
        %v712 = vunpack.c.l.b16 %v696
        %v713 = vpack.c.b16 %v712, %v711
        %vm715 = vcmask 130048
        %v717 = vsel %vm715, %v708, 0
        %719 = vmatprep.subr.bf16.mxu0 0
        %720 = vmatpush1.bf16.msra.mxu0 0
        %721 = vmatprep.subr.bf16.mxu0 0
        %722 = vmatpush1.bf16.msra.mxu0 0
        %723 = vmatprep.subr.bf16.mxu0 0
        %724 = vmatpush1.bf16.msra.mxu0 0
        %725 = vmatprep.subr.bf16.mxu0 0
        %726 = vmatpush1.bf16.msra.mxu0 0
        %727 = vmatprep.subr.bf16.mxu0 0
        %728 = vmatpush1.bf16.msra.mxu0 0
        %729 = vmatprep.subr.bf16.mxu0 0
        %730 = vmatpush1.bf16.msra.mxu0 0
        %731 = vmatprep.subr.bf16.mxu0 0
        %732 = vmatpush1.bf16.msra.mxu0 0
        %733 = vmatprep.subr.bf16.mxu0 0
        %734 = vmatpush1.bf16.msra.mxu0 %v713
        %735 = vmatprep.subr.bf16.mxu0 0
        %736 = vmatpush2.bf16.msra.mxu0 0
        %737 = vmatprep.subr.bf16.mxu0 0
        %738 = vmatpush2.bf16.msra.mxu0 0
        %739 = vmatprep.subr.bf16.mxu0 0
        %740 = vmatpush2.bf16.msra.mxu0 0
        %741 = vmatprep.subr.bf16.mxu0 0
        %742 = vmatpush2.bf16.msra.mxu0 0
        %743 = vmatprep.subr.bf16.mxu0 0
        %744 = vmatpush2.bf16.msra.mxu0 0
        %745 = vmatprep.subr.bf16.mxu0 0
        %746 = vmatpush2.bf16.msra.mxu0 0
        %747 = vmatprep.subr.bf16.mxu0 0
        %748 = vmatpush2.bf16.msra.mxu0 0
        %749 = vmatprep.subr.bf16.mxu0 0
        %750 = vmatpush2.bf16.msra.mxu0 0
        %751 = vmatprep.mubr.bf16.mxu0 0
        %752 = vmatmul.mubr.bf16.gmra.mxu0 %v717
        %v753 = vpop.f32.mrf.mxu0
        %v754 = vadd.f32 %v702, %v753
        %v755 = vpop.f32.mrf.mxu0
        %v756 = vpop.f32.mrf.mxu0
        %v757 = vadd.f32 %v702, %v756
        %v758 = vpop.f32.mrf.mxu0
        %759 = vdwg.mxu0
        %v760 = vld [vmem:[%s519] sm:$0xf]
        %v761 = vld [vmem:[%s519 + $0x4] sm:$0xf]
        %v762 = vld [vmem:[#allocation18] sm:$0xf]
        %v763 = vld [vmem:[#allocation18 + $0x4] sm:$0xf]
        %v764 = vld [vmem:[#allocation20] sm:$0x1]
        %v766 = vlaneseq
        %v767 = vshrl.u32 %v766, 7
        %v768 = vsub.s32 0, %v767
        %v769 = vrot.slane %v764, %v768
        %v773 = vunpack.c.l.b16 %v760
        %v774 = vunpack.c.l.b16 %v761
        %v775 = vpack.c.b16 %v774, %v773
        %v778 = vunpack.c.l.b16 %v762
        %v779 = vunpack.c.l.b16 %v763
        %v780 = vpack.c.b16 %v779, %v778
        %v783 = vsel %vm715, %v775, 0
        %785 = vmatprep.subr.bf16.mxu0 0
        %786 = vmatpush1.bf16.msra.mxu0 0
        %787 = vmatprep.subr.bf16.mxu0 0
        %788 = vmatpush1.bf16.msra.mxu0 0
        %789 = vmatprep.subr.bf16.mxu0 0
        %790 = vmatpush1.bf16.msra.mxu0 0
        %791 = vmatprep.subr.bf16.mxu0 0
        %792 = vmatpush1.bf16.msra.mxu0 0
        %793 = vmatprep.subr.bf16.mxu0 0
        %794 = vmatpush1.bf16.msra.mxu0 0
        %795 = vmatprep.subr.bf16.mxu0 0
        %796 = vmatpush1.bf16.msra.mxu0 0
        %797 = vmatprep.subr.bf16.mxu0 0
        %798 = vmatpush1.bf16.msra.mxu0 0
        %799 = vmatprep.subr.bf16.mxu0 0
        %800 = vmatpush1.bf16.msra.mxu0 %v780
        %801 = vmatprep.subr.bf16.mxu0 0
        %802 = vmatpush2.bf16.msra.mxu0 0
        %803 = vmatprep.subr.bf16.mxu0 0
        %804 = vmatpush2.bf16.msra.mxu0 0
        %805 = vmatprep.subr.bf16.mxu0 0
        %806 = vmatpush2.bf16.msra.mxu0 0
        %807 = vmatprep.subr.bf16.mxu0 0
        %808 = vmatpush2.bf16.msra.mxu0 0
        %809 = vmatprep.subr.bf16.mxu0 0
        %810 = vmatpush2.bf16.msra.mxu0 0
        %811 = vmatprep.subr.bf16.mxu0 0
        %812 = vmatpush2.bf16.msra.mxu0 0
        %813 = vmatprep.subr.bf16.mxu0 0
        %814 = vmatpush2.bf16.msra.mxu0 0
        %815 = vmatprep.subr.bf16.mxu0 0
        %816 = vmatpush2.bf16.msra.mxu0 0
        %817 = vmatprep.mubr.bf16.mxu0 0
        %818 = vmatmul.mubr.bf16.gmra.mxu0 %v783
        %v819 = vpop.f32.mrf.mxu0
        %v820 = vadd.f32 %v769, %v819
        %v821 = vpop.f32.mrf.mxu0
        %v822 = vpop.f32.mrf.mxu0
        %v823 = vadd.f32 %v769, %v822
        %v824 = vpop.f32.mrf.mxu0
        %825 = vdwg.mxu0
        %828 = vrot.lane.b32.xlu0 %v754, 120
        %v829 = vpop.permute.xlu0 %828
        %830 = vrot.lane.b32.xlu0 %v757, 120
        %v831 = vpop.permute.xlu0 %830
        %834 = vrot.lane.b32.xlu0 %v754, 112
        %v835 = vpop.permute.xlu0 %834
        %836 = vrot.lane.b32.xlu0 %v757, 112
        %v837 = vpop.permute.xlu0 %836
        %840 = vrot.lane.b32.xlu0 %v754, 104
        %v841 = vpop.permute.xlu0 %840
        %842 = vrot.lane.b32.xlu0 %v757, 104
        %v843 = vpop.permute.xlu0 %842
        %v846 = vpack.c.bf16 %v757, %v754
        %v847 = vpack.c.bf16 %v831, %v829
        %v848 = vpack.c.bf16 %v837, %v835
        %v849 = vpack.c.bf16 %v843, %v841
        %852 = vrot.lane.b32.xlu0 %v820, 120
        %v853 = vpop.permute.xlu0 %852
        %854 = vrot.lane.b32.xlu0 %v823, 120
        %v855 = vpop.permute.xlu0 %854
        %858 = vrot.lane.b32.xlu0 %v820, 112
        %v859 = vpop.permute.xlu0 %858
        %860 = vrot.lane.b32.xlu0 %v823, 112
        %v861 = vpop.permute.xlu0 %860
        %864 = vrot.lane.b32.xlu0 %v820, 104
        %v865 = vpop.permute.xlu0 %864
        %866 = vrot.lane.b32.xlu0 %v823, 104
        %v867 = vpop.permute.xlu0 %866
        %v870 = vpack.c.bf16 %v823, %v820
        %v871 = vpack.c.bf16 %v855, %v853
        %v872 = vpack.c.bf16 %v861, %v859
        %v873 = vpack.c.bf16 %v867, %v865
        %v874 = vld [vmem:[#allocation2] sm:$0xf]
        %v875 = vld [vmem:[#allocation2 + $0x4] sm:$0xf]
        %v876 = vld [vmem:[#allocation2 + $0x8] sm:$0xf]
        %v877 = vld [vmem:[#allocation2 + $0xc] sm:$0xf]
        %vm878 = vcmask 64512
        %v880 = vsel %vm878, %v874, 0
        %v883 = vsel %vm878, %v846, 0
        %885 = vmatprep.subr.bf16.mxu0 0
        %886 = vmatpush1.bf16.xpose.msra.mxu0 0
        %887 = vmatprep.subr.bf16.mxu0 0
        %888 = vmatpush1.bf16.xpose.msra.mxu0 0
        %889 = vmatprep.subr.bf16.mxu0 0
        %890 = vmatpush1.bf16.xpose.msra.mxu0 0
        %891 = vmatprep.subr.bf16.mxu0 0
        %892 = vmatpush1.bf16.xpose.msra.mxu0 0
        %893 = vmatprep.subr.bf16.mxu0 0
        %894 = vmatpush1.bf16.xpose.msra.mxu0 0
        %895 = vmatprep.subr.bf16.mxu0 0
        %896 = vmatpush1.bf16.xpose.msra.mxu0 0
        %897 = vmatprep.subr.bf16.mxu0 0
        %898 = vmatpush1.bf16.xpose.msra.mxu0 0
        %899 = vmatprep.subr.bf16.mxu0 0
        %900 = vmatpush1.bf16.xpose.msra.mxu0 %v883
        %901 = vmatprep.subr.bf16.mxu0 0
        %902 = vmatpush2.bf16.xpose.msra.mxu0 0
        %903 = vmatprep.subr.bf16.mxu0 0
        %904 = vmatpush2.bf16.xpose.msra.mxu0 0
        %905 = vmatprep.subr.bf16.mxu0 0
        %906 = vmatpush2.bf16.xpose.msra.mxu0 0
        %907 = vmatprep.subr.bf16.mxu0 0
        %908 = vmatpush2.bf16.xpose.msra.mxu0 0
        %909 = vmatprep.subr.bf16.mxu0 0
        %910 = vmatpush2.bf16.xpose.msra.mxu0 0
        %911 = vmatprep.subr.bf16.mxu0 0
        %912 = vmatpush2.bf16.xpose.msra.mxu0 0
        %913 = vmatprep.subr.bf16.mxu0 0
        %914 = vmatpush2.bf16.xpose.msra.mxu0 0
        %915 = vmatprep.subr.bf16.mxu0 0
        %916 = vmatpush2.bf16.xpose.msra.mxu0 0
        %917 = vmatprep.mubr.bf16.mxu0 0
        %918 = vmatmul.mubr.bf16.gmra.mxu0 %v880
        %v919 = vpop.f32.mrf.mxu0
        %v920 = vadd.f32 0.0, %v919
        %v921 = vpop.f32.mrf.mxu0
        %v922 = vpop.f32.mrf.mxu0
        %v923 = vpop.f32.mrf.mxu0
        %924 = vdwg.mxu0
        %v926 = vsel %vm878, %v875, 0
        %v929 = vsel %vm878, %v847, 0
        %931 = vmatprep.subr.bf16.mxu0 0
        %932 = vmatpush1.bf16.xpose.msra.mxu0 0
        %933 = vmatprep.subr.bf16.mxu0 0
        %934 = vmatpush1.bf16.xpose.msra.mxu0 0
        %935 = vmatprep.subr.bf16.mxu0 0
        %936 = vmatpush1.bf16.xpose.msra.mxu0 0
        %937 = vmatprep.subr.bf16.mxu0 0
        %938 = vmatpush1.bf16.xpose.msra.mxu0 0
        %939 = vmatprep.subr.bf16.mxu0 0
        %940 = vmatpush1.bf16.xpose.msra.mxu0 0
        %941 = vmatprep.subr.bf16.mxu0 0
        %942 = vmatpush1.bf16.xpose.msra.mxu0 0
        %943 = vmatprep.subr.bf16.mxu0 0
        %944 = vmatpush1.bf16.xpose.msra.mxu0 0
        %945 = vmatprep.subr.bf16.mxu0 0
        %946 = vmatpush1.bf16.xpose.msra.mxu0 %v929
        %947 = vmatprep.subr.bf16.mxu0 0
        %948 = vmatpush2.bf16.xpose.msra.mxu0 0
        %949 = vmatprep.subr.bf16.mxu0 0
        %950 = vmatpush2.bf16.xpose.msra.mxu0 0
        %951 = vmatprep.subr.bf16.mxu0 0
        %952 = vmatpush2.bf16.xpose.msra.mxu0 0
        %953 = vmatprep.subr.bf16.mxu0 0
        %954 = vmatpush2.bf16.xpose.msra.mxu0 0
        %955 = vmatprep.subr.bf16.mxu0 0
        %956 = vmatpush2.bf16.xpose.msra.mxu0 0
        %957 = vmatprep.subr.bf16.mxu0 0
        %958 = vmatpush2.bf16.xpose.msra.mxu0 0
        %959 = vmatprep.subr.bf16.mxu0 0
        %960 = vmatpush2.bf16.xpose.msra.mxu0 0
        %961 = vmatprep.subr.bf16.mxu0 0
        %962 = vmatpush2.bf16.xpose.msra.mxu0 0
        %963 = vmatprep.mubr.bf16.mxu0 0
        %964 = vmatmul.mubr.bf16.gmra.mxu0 %v926
        %v965 = vpop.f32.mrf.mxu0
        %v966 = vadd.f32 0.0, %v965
        %v967 = vpop.f32.mrf.mxu0
        %v968 = vpop.f32.mrf.mxu0
        %v969 = vpop.f32.mrf.mxu0
        %970 = vdwg.mxu0
        %v972 = vsel %vm878, %v876, 0
        %v975 = vsel %vm878, %v848, 0
        %977 = vmatprep.subr.bf16.mxu0 0
        %978 = vmatpush1.bf16.xpose.msra.mxu0 0
        %979 = vmatprep.subr.bf16.mxu0 0
        %980 = vmatpush1.bf16.xpose.msra.mxu0 0
        %981 = vmatprep.subr.bf16.mxu0 0
        %982 = vmatpush1.bf16.xpose.msra.mxu0 0
        %983 = vmatprep.subr.bf16.mxu0 0
        %984 = vmatpush1.bf16.xpose.msra.mxu0 0
        %985 = vmatprep.subr.bf16.mxu0 0
        %986 = vmatpush1.bf16.xpose.msra.mxu0 0
        %987 = vmatprep.subr.bf16.mxu0 0
        %988 = vmatpush1.bf16.xpose.msra.mxu0 0
        %989 = vmatprep.subr.bf16.mxu0 0
        %990 = vmatpush1.bf16.xpose.msra.mxu0 0
        %991 = vmatprep.subr.bf16.mxu0 0
        %992 = vmatpush1.bf16.xpose.msra.mxu0 %v975
        %993 = vmatprep.subr.bf16.mxu0 0
        %994 = vmatpush2.bf16.xpose.msra.mxu0 0
        %995 = vmatprep.subr.bf16.mxu0 0
        %996 = vmatpush2.bf16.xpose.msra.mxu0 0
        %997 = vmatprep.subr.bf16.mxu0 0
        %998 = vmatpush2.bf16.xpose.msra.mxu0 0
        %999 = vmatprep.subr.bf16.mxu0 0
        %1000 = vmatpush2.bf16.xpose.msra.mxu0 0
        %1001 = vmatprep.subr.bf16.mxu0 0
        %1002 = vmatpush2.bf16.xpose.msra.mxu0 0
        %1003 = vmatprep.subr.bf16.mxu0 0
        %1004 = vmatpush2.bf16.xpose.msra.mxu0 0
        %1005 = vmatprep.subr.bf16.mxu0 0
        %1006 = vmatpush2.bf16.xpose.msra.mxu0 0
        %1007 = vmatprep.subr.bf16.mxu0 0
        %1008 = vmatpush2.bf16.xpose.msra.mxu0 0
        %1009 = vmatprep.mubr.bf16.mxu0 0
        %1010 = vmatmul.mubr.bf16.gmra.mxu0 %v972
        %v1011 = vpop.f32.mrf.mxu0
        %v1012 = vadd.f32 0.0, %v1011
        %v1013 = vpop.f32.mrf.mxu0
        %v1014 = vpop.f32.mrf.mxu0
        %v1015 = vpop.f32.mrf.mxu0
        %1016 = vdwg.mxu0
        %v1018 = vsel %vm878, %v877, 0
        %v1021 = vsel %vm878, %v849, 0
        %1023 = vmatprep.subr.bf16.mxu0 0
        %1024 = vmatpush1.bf16.xpose.msra.mxu0 0
        %1025 = vmatprep.subr.bf16.mxu0 0
        %1026 = vmatpush1.bf16.xpose.msra.mxu0 0
        %1027 = vmatprep.subr.bf16.mxu0 0
        %1028 = vmatpush1.bf16.xpose.msra.mxu0 0
        %1029 = vmatprep.subr.bf16.mxu0 0
        %1030 = vmatpush1.bf16.xpose.msra.mxu0 0
        %1031 = vmatprep.subr.bf16.mxu0 0
        %1032 = vmatpush1.bf16.xpose.msra.mxu0 0
        %1033 = vmatprep.subr.bf16.mxu0 0
        %1034 = vmatpush1.bf16.xpose.msra.mxu0 0
        %1035 = vmatprep.subr.bf16.mxu0 0
        %1036 = vmatpush1.bf16.xpose.msra.mxu0 0
        %1037 = vmatprep.subr.bf16.mxu0 0
        %1038 = vmatpush1.bf16.xpose.msra.mxu0 %v1021
        %1039 = vmatprep.subr.bf16.mxu0 0
        %1040 = vmatpush2.bf16.xpose.msra.mxu0 0
        %1041 = vmatprep.subr.bf16.mxu0 0
        %1042 = vmatpush2.bf16.xpose.msra.mxu0 0
        %1043 = vmatprep.subr.bf16.mxu0 0
        %1044 = vmatpush2.bf16.xpose.msra.mxu0 0
        %1045 = vmatprep.subr.bf16.mxu0 0
        %1046 = vmatpush2.bf16.xpose.msra.mxu0 0
        %1047 = vmatprep.subr.bf16.mxu0 0
        %1048 = vmatpush2.bf16.xpose.msra.mxu0 0
        %1049 = vmatprep.subr.bf16.mxu0 0
        %1050 = vmatpush2.bf16.xpose.msra.mxu0 0
        %1051 = vmatprep.subr.bf16.mxu0 0
        %1052 = vmatpush2.bf16.xpose.msra.mxu0 0
        %1053 = vmatprep.subr.bf16.mxu0 0
        %1054 = vmatpush2.bf16.xpose.msra.mxu0 0
        %1055 = vmatprep.mubr.bf16.mxu0 0
        %1056 = vmatmul.mubr.bf16.gmra.mxu0 %v1018
        %v1057 = vpop.f32.mrf.mxu0
        %v1058 = vadd.f32 0.0, %v1057
        %v1059 = vpop.f32.mrf.mxu0
        %v1060 = vpop.f32.mrf.mxu0
        %v1061 = vpop.f32.mrf.mxu0
        %1062 = vdwg.mxu0
        %v1063 = vld [vmem:[#allocation3] sm:$0xff]
        %v1064 = vld [vmem:[#allocation3 + $0x8] sm:$0xff]
        %v1065 = vld [vmem:[#allocation3 + $0x10] sm:$0xff]
        %v1066 = vld [vmem:[#allocation3 + $0x18] sm:$0xff]
        %v1067 = vsel %vm715, %v920, -inf
        %1068 = vmax.xlane.f32.xlu0 %v1067
        %v1069 = vpop.xlane.xlu0 %1068
        %v1070 = vsel %vm715, %v966, -inf
        %1071 = vmax.xlane.f32.xlu0 %v1070
        %v1072 = vpop.xlane.xlu0 %1071
        %v1073 = vsel %vm715, %v1012, -inf
        %1074 = vmax.xlane.f32.xlu0 %v1073
        %v1075 = vpop.xlane.xlu0 %1074
        %v1076 = vsel %vm715, %v1058, -inf
        %1077 = vmax.xlane.f32.xlu0 %v1076
        %v1078 = vpop.xlane.xlu0 %1077
        %v1079 = vmax.f32 %v1063, %v1069
        %v1080 = vmax.f32 %v1064, %v1072
        %v1081 = vmax.f32 %v1065, %v1075
        %v1082 = vmax.f32 %v1066, %v1078
        %v1083 = vsub.f32 %v1063, %v1079
        %v1084 = vsub.f32 %v1064, %v1080
        %v1085 = vsub.f32 %v1065, %v1081
        %v1086 = vsub.f32 %v1066, %v1082
        %v1087 = vmul.f32 %v1083, 1.442695
        %v1088 = vpow.pop %v1087
        %v1089 = vmul.f32 %v1084, 1.442695
        %v1090 = vpow.pop %v1089
        %v1091 = vmul.f32 %v1085, 1.442695
        %v1092 = vpow.pop %v1091
        %v1093 = vmul.f32 %v1086, 1.442695
        %v1094 = vpow.pop %v1093
        %1096 = vset.pattern.permute.xlu0 0
        %1097 = vperm.xlu0 %1096, %v1079
        %v1098 = vpop.permute.xlu0 %1097
        %1101 = vset.pattern.permute.xlu0 0
        %1102 = vperm.xlu0 %1101, %v1080
        %v1103 = vpop.permute.xlu0 %1102
        %1106 = vset.pattern.permute.xlu0 0
        %1107 = vperm.xlu0 %1106, %v1081
        %v1108 = vpop.permute.xlu0 %1107
        %1111 = vset.pattern.permute.xlu0 0
        %1112 = vperm.xlu0 %1111, %v1082
        %v1113 = vpop.permute.xlu0 %1112
        %v1115 = vsub.f32 %v920, %v1098
        %v1116 = vsub.f32 %v966, %v1103
        %v1117 = vsub.f32 %v1012, %v1108
        %v1118 = vsub.f32 %v1058, %v1113
        %v1119 = vmul.f32 %v1115, 1.442695
        %v1120 = vpow.pop %v1119
        %v1121 = vmul.f32 %v1116, 1.442695
        %v1122 = vpow.pop %v1121
        %v1123 = vmul.f32 %v1117, 1.442695
        %v1124 = vpow.pop %v1123
        %v1125 = vmul.f32 %v1118, 1.442695
        %v1126 = vpow.pop %v1125
        %v1127 = vsel %vm715, %v1120, 0.0
        %1128 = vadd.xlane.f32.xlu0 %v1127
        %v1129 = vpop.xlane.xlu0 %1128
        %v1130 = vsel %vm715, %v1122, 0.0
        %1131 = vadd.xlane.f32.xlu0 %v1130
        %v1132 = vpop.xlane.xlu0 %1131
        %v1133 = vsel %vm715, %v1124, 0.0
        %1134 = vadd.xlane.f32.xlu0 %v1133
        %v1135 = vpop.xlane.xlu0 %1134
        %v1136 = vsel %vm715, %v1126, 0.0
        %1137 = vadd.xlane.f32.xlu0 %v1136
        %v1138 = vpop.xlane.xlu0 %1137
        %v1139 = vpack.c.bf16 %v1120, %v1120
        %v1140 = vpack.c.bf16 %v1122, %v1122
        %v1141 = vpack.c.bf16 %v1124, %v1124
        %v1142 = vpack.c.bf16 %v1126, %v1126
        %v1143 = vld [vmem:[#allocation4] sm:$0xff]
        %v1144 = vld [vmem:[#allocation4 + $0x8] sm:$0xff]
        %v1145 = vld [vmem:[#allocation4 + $0x10] sm:$0xff]
        %v1146 = vld [vmem:[#allocation4 + $0x18] sm:$0xff]
        %v1147 = vmul.f32 %v1088, %v1143
        %v1148 = vmul.f32 %v1090, %v1144
        %v1149 = vmul.f32 %v1092, %v1145
        %v1150 = vmul.f32 %v1094, %v1146
        %v1151 = vadd.f32 %v1147, %v1129
        %v1152 = vadd.f32 %v1148, %v1132
        %v1153 = vadd.f32 %v1149, %v1135
        %v1154 = vadd.f32 %v1150, %v1138
        %vm1155 = vcmask 7168
        %1156 = vst.msk [vmem:[#allocation4] sm:$0xff] %vm1155, %v1151
        %1157 = vst.msk [vmem:[#allocation4 + $0x8] sm:$0xff] %vm1155, %v1152
        %1158 = vst.msk [vmem:[#allocation4 + $0x10] sm:$0xff] %vm1155, %v1153
        %1159 = vst.msk [vmem:[#allocation4 + $0x18] sm:$0xff] %vm1155, %v1154
        %v1160 = vld [vmem:[#allocation5] sm:$0xff]
        %v1161 = vld [vmem:[#allocation5 + $0x8] sm:$0xff]
        %v1162 = vld [vmem:[#allocation5 + $0x10] sm:$0xff]
        %v1163 = vld [vmem:[#allocation5 + $0x18] sm:$0xff]
        %1165 = vset.pattern.permute.xlu0 0
        %1166 = vperm.xlu0 %1165, %v1088
        %v1167 = vpop.permute.xlu0 %1166
        %1170 = vset.pattern.permute.xlu0 0
        %1171 = vperm.xlu0 %1170, %v1090
        %v1172 = vpop.permute.xlu0 %1171
        %1175 = vset.pattern.permute.xlu0 0
        %1176 = vperm.xlu0 %1175, %v1092
        %v1177 = vpop.permute.xlu0 %1176
        %1180 = vset.pattern.permute.xlu0 0
        %1181 = vperm.xlu0 %1180, %v1094
        %v1182 = vpop.permute.xlu0 %1181
        %v1184 = vmul.f32 %v1167, %v1160
        %v1185 = vmul.f32 %v1172, %v1161
        %v1186 = vmul.f32 %v1177, %v1162
        %v1187 = vmul.f32 %v1182, %v1163
        %v1189 = vsel %vm715, %v1139, 0
        %1191 = vmatprep.subr.bf16.mxu0 0
        %1192 = vmatpush1.bf16.msra.mxu0 0
        %1193 = vmatprep.subr.bf16.mxu0 0
        %1194 = vmatpush1.bf16.msra.mxu0 0
        %1195 = vmatprep.subr.bf16.mxu0 0
        %1196 = vmatpush1.bf16.msra.mxu0 0
        %1197 = vmatprep.subr.bf16.mxu0 0
        %1198 = vmatpush1.bf16.msra.mxu0 0
        %1199 = vmatprep.subr.bf16.mxu0 0
        %1200 = vmatpush1.bf16.msra.mxu0 0
        %1201 = vmatprep.subr.bf16.mxu0 0
        %1202 = vmatpush1.bf16.msra.mxu0 0
        %1203 = vmatprep.subr.bf16.mxu0 0
        %1204 = vmatpush1.bf16.msra.mxu0 0
        %1205 = vmatprep.subr.bf16.mxu0 0
        %1206 = vmatpush1.bf16.msra.mxu0 %v870
        %1207 = vmatprep.subr.bf16.mxu0 0
        %1208 = vmatpush2.bf16.msra.mxu0 0
        %1209 = vmatprep.subr.bf16.mxu0 0
        %1210 = vmatpush2.bf16.msra.mxu0 0
        %1211 = vmatprep.subr.bf16.mxu0 0
        %1212 = vmatpush2.bf16.msra.mxu0 0
        %1213 = vmatprep.subr.bf16.mxu0 0
        %1214 = vmatpush2.bf16.msra.mxu0 0
        %1215 = vmatprep.subr.bf16.mxu0 0
        %1216 = vmatpush2.bf16.msra.mxu0 0
        %1217 = vmatprep.subr.bf16.mxu0 0
        %1218 = vmatpush2.bf16.msra.mxu0 0
        %1219 = vmatprep.subr.bf16.mxu0 0
        %1220 = vmatpush2.bf16.msra.mxu0 0
        %1221 = vmatprep.subr.bf16.mxu0 0
        %1222 = vmatpush2.bf16.msra.mxu0 0
        %1223 = vmatprep.mubr.bf16.mxu0 0
        %1224 = vmatmul.mubr.bf16.gmra.mxu0 %v1189
        %v1225 = vpop.f32.mrf.mxu0
        %v1226 = vadd.f32 0.0, %v1225
        %v1227 = vpop.f32.mrf.mxu0
        %v1228 = vpop.f32.mrf.mxu0
        %v1229 = vpop.f32.mrf.mxu0
        %1230 = vdwg.mxu0
        %v1232 = vsel %vm715, %v1140, 0
        %1234 = vmatprep.subr.bf16.mxu0 0
        %1235 = vmatpush1.bf16.msra.mxu0 0
        %1236 = vmatprep.subr.bf16.mxu0 0
        %1237 = vmatpush1.bf16.msra.mxu0 0
        %1238 = vmatprep.subr.bf16.mxu0 0
        %1239 = vmatpush1.bf16.msra.mxu0 0
        %1240 = vmatprep.subr.bf16.mxu0 0
        %1241 = vmatpush1.bf16.msra.mxu0 0
        %1242 = vmatprep.subr.bf16.mxu0 0
        %1243 = vmatpush1.bf16.msra.mxu0 0
        %1244 = vmatprep.subr.bf16.mxu0 0
        %1245 = vmatpush1.bf16.msra.mxu0 0
        %1246 = vmatprep.subr.bf16.mxu0 0
        %1247 = vmatpush1.bf16.msra.mxu0 0
        %1248 = vmatprep.subr.bf16.mxu0 0
        %1249 = vmatpush1.bf16.msra.mxu0 %v871
        %1250 = vmatprep.subr.bf16.mxu0 0
        %1251 = vmatpush2.bf16.msra.mxu0 0
        %1252 = vmatprep.subr.bf16.mxu0 0
        %1253 = vmatpush2.bf16.msra.mxu0 0
        %1254 = vmatprep.subr.bf16.mxu0 0
        %1255 = vmatpush2.bf16.msra.mxu0 0
        %1256 = vmatprep.subr.bf16.mxu0 0
        %1257 = vmatpush2.bf16.msra.mxu0 0
        %1258 = vmatprep.subr.bf16.mxu0 0
        %1259 = vmatpush2.bf16.msra.mxu0 0
        %1260 = vmatprep.subr.bf16.mxu0 0
        %1261 = vmatpush2.bf16.msra.mxu0 0
        %1262 = vmatprep.subr.bf16.mxu0 0
        %1263 = vmatpush2.bf16.msra.mxu0 0
        %1264 = vmatprep.subr.bf16.mxu0 0
        %1265 = vmatpush2.bf16.msra.mxu0 0
        %1266 = vmatprep.mubr.bf16.mxu0 0
        %1267 = vmatmul.mubr.bf16.gmra.mxu0 %v1232
        %v1268 = vpop.f32.mrf.mxu0
        %v1269 = vadd.f32 0.0, %v1268
        %v1270 = vpop.f32.mrf.mxu0
        %v1271 = vpop.f32.mrf.mxu0
        %v1272 = vpop.f32.mrf.mxu0
        %1273 = vdwg.mxu0
        %v1275 = vsel %vm715, %v1141, 0
        %1277 = vmatprep.subr.bf16.mxu0 0
        %1278 = vmatpush1.bf16.msra.mxu0 0
        %1279 = vmatprep.subr.bf16.mxu0 0
        %1280 = vmatpush1.bf16.msra.mxu0 0
        %1281 = vmatprep.subr.bf16.mxu0 0
        %1282 = vmatpush1.bf16.msra.mxu0 0
        %1283 = vmatprep.subr.bf16.mxu0 0
        %1284 = vmatpush1.bf16.msra.mxu0 0
        %1285 = vmatprep.subr.bf16.mxu0 0
        %1286 = vmatpush1.bf16.msra.mxu0 0
        %1287 = vmatprep.subr.bf16.mxu0 0
        %1288 = vmatpush1.bf16.msra.mxu0 0
        %1289 = vmatprep.subr.bf16.mxu0 0
        %1290 = vmatpush1.bf16.msra.mxu0 0
        %1291 = vmatprep.subr.bf16.mxu0 0
        %1292 = vmatpush1.bf16.msra.mxu0 %v872
        %1293 = vmatprep.subr.bf16.mxu0 0
        %1294 = vmatpush2.bf16.msra.mxu0 0
        %1295 = vmatprep.subr.bf16.mxu0 0
        %1296 = vmatpush2.bf16.msra.mxu0 0
        %1297 = vmatprep.subr.bf16.mxu0 0
        %1298 = vmatpush2.bf16.msra.mxu0 0
        %1299 = vmatprep.subr.bf16.mxu0 0
        %1300 = vmatpush2.bf16.msra.mxu0 0
        %1301 = vmatprep.subr.bf16.mxu0 0
        %1302 = vmatpush2.bf16.msra.mxu0 0
        %1303 = vmatprep.subr.bf16.mxu0 0
        %1304 = vmatpush2.bf16.msra.mxu0 0
        %1305 = vmatprep.subr.bf16.mxu0 0
        %1306 = vmatpush2.bf16.msra.mxu0 0
        %1307 = vmatprep.subr.bf16.mxu0 0
        %1308 = vmatpush2.bf16.msra.mxu0 0
        %1309 = vmatprep.mubr.bf16.mxu0 0
        %1310 = vmatmul.mubr.bf16.gmra.mxu0 %v1275
        %v1311 = vpop.f32.mrf.mxu0
        %v1312 = vadd.f32 0.0, %v1311
        %v1313 = vpop.f32.mrf.mxu0
        %v1314 = vpop.f32.mrf.mxu0
        %v1315 = vpop.f32.mrf.mxu0
        %1316 = vdwg.mxu0
        %v1318 = vsel %vm715, %v1142, 0
        %1320 = vmatprep.subr.bf16.mxu0 0
        %1321 = vmatpush1.bf16.msra.mxu0 0
        %1322 = vmatprep.subr.bf16.mxu0 0
        %1323 = vmatpush1.bf16.msra.mxu0 0
        %1324 = vmatprep.subr.bf16.mxu0 0
        %1325 = vmatpush1.bf16.msra.mxu0 0
        %1326 = vmatprep.subr.bf16.mxu0 0
        %1327 = vmatpush1.bf16.msra.mxu0 0
        %1328 = vmatprep.subr.bf16.mxu0 0
        %1329 = vmatpush1.bf16.msra.mxu0 0
        %1330 = vmatprep.subr.bf16.mxu0 0
        %1331 = vmatpush1.bf16.msra.mxu0 0
        %1332 = vmatprep.subr.bf16.mxu0 0
        %1333 = vmatpush1.bf16.msra.mxu0 0
        %1334 = vmatprep.subr.bf16.mxu0 0
        %1335 = vmatpush1.bf16.msra.mxu0 %v873
        %1336 = vmatprep.subr.bf16.mxu0 0
        %1337 = vmatpush2.bf16.msra.mxu0 0
        %1338 = vmatprep.subr.bf16.mxu0 0
        %1339 = vmatpush2.bf16.msra.mxu0 0
        %1340 = vmatprep.subr.bf16.mxu0 0
        %1341 = vmatpush2.bf16.msra.mxu0 0
        %1342 = vmatprep.subr.bf16.mxu0 0
        %1343 = vmatpush2.bf16.msra.mxu0 0
        %1344 = vmatprep.subr.bf16.mxu0 0
        %1345 = vmatpush2.bf16.msra.mxu0 0
        %1346 = vmatprep.subr.bf16.mxu0 0
        %1347 = vmatpush2.bf16.msra.mxu0 0
        %1348 = vmatprep.subr.bf16.mxu0 0
        %1349 = vmatpush2.bf16.msra.mxu0 0
        %1350 = vmatprep.subr.bf16.mxu0 0
        %1351 = vmatpush2.bf16.msra.mxu0 0
        %1352 = vmatprep.mubr.bf16.mxu0 0
        %1353 = vmatmul.mubr.bf16.gmra.mxu0 %v1318
        %v1354 = vpop.f32.mrf.mxu0
        %v1355 = vadd.f32 0.0, %v1354
        %v1356 = vpop.f32.mrf.mxu0
        %v1357 = vpop.f32.mrf.mxu0
        %v1358 = vpop.f32.mrf.mxu0
        %1359 = vdwg.mxu0
        %v1360 = vadd.f32 %v1184, %v1226
        %v1361 = vadd.f32 %v1185, %v1269
        %v1362 = vadd.f32 %v1186, %v1312
        %v1363 = vadd.f32 %v1187, %v1355
        %1364 = vst.msk [vmem:[#allocation5] sm:$0xff] %vm878, %v1360
        %1365 = vst.msk [vmem:[#allocation5 + $0x8] sm:$0xff] %vm878, %v1361
        %1366 = vst.msk [vmem:[#allocation5 + $0x10] sm:$0xff] %vm878, %v1362
        %1367 = vst.msk [vmem:[#allocation5 + $0x18] sm:$0xff] %vm878, %v1363
        %1368 = vst.msk [vmem:[#allocation3] sm:$0xff] %vm1155, %v1079
        %1369 = vst.msk [vmem:[#allocation3 + $0x8] sm:$0xff] %vm1155, %v1080
        %1370 = vst.msk [vmem:[#allocation3 + $0x10] sm:$0xff] %vm1155, %v1081
        %1371 = vst.msk [vmem:[#allocation3 + $0x18] sm:$0xff] %vm1155, %v1082
        // Predicated region
        $region105: #{tpu_custom_call.1} parent=63 // pred_check
          %p1372 = pneg %p595
        $region106: #{tpu_custom_call.1} parent=63 // pred_check_branch
          %1374 = sbr.rel (%p1372) target = $region108
        $region107: #{tpu_custom_call.1} parent=63 // pred_region
          %v1375 = vld [vmem:[#allocation5] sm:$0xff]
          %v1376 = vld [vmem:[#allocation5 + $0x8] sm:$0xff]
          %v1377 = vld [vmem:[#allocation5 + $0x10] sm:$0xff]
          %v1378 = vld [vmem:[#allocation5 + $0x18] sm:$0xff]
          %v1379 = vld [vmem:[#allocation4] sm:$0xff]
          %v1380 = vld [vmem:[#allocation4 + $0x8] sm:$0xff]
          %v1381 = vld [vmem:[#allocation4 + $0x10] sm:$0xff]
          %v1382 = vld [vmem:[#allocation4 + $0x18] sm:$0xff]
          %v1383 = vrcp.pop %v1379
          %v1384 = vrcp.pop %v1380
          %v1385 = vrcp.pop %v1381
          %v1386 = vrcp.pop %v1382
          %1388 = vset.pattern.permute.xlu0 0
          %1389 = vperm.xlu0 %1388, %v1383
          %v1390 = vpop.permute.xlu0 %1389
          %1393 = vset.pattern.permute.xlu0 0
          %1394 = vperm.xlu0 %1393, %v1384
          %v1395 = vpop.permute.xlu0 %1394
          %1398 = vset.pattern.permute.xlu0 0
          %1399 = vperm.xlu0 %1398, %v1385
          %v1400 = vpop.permute.xlu0 %1399
          %1403 = vset.pattern.permute.xlu0 0
          %1404 = vperm.xlu0 %1403, %v1386
          %v1405 = vpop.permute.xlu0 %1404
          %v1407 = vmul.f32 %v1375, %v1390
          %v1408 = vmul.f32 %v1376, %v1395
          %v1409 = vmul.f32 %v1377, %v1400
          %v1410 = vmul.f32 %v1378, %v1405
          %1412 = vrot.lane.b32.xlu0 %v1408, 8
          %v1413 = vpop.permute.xlu0 %1412
          %1416 = vrot.lane.b32.xlu0 %v1409, 16
          %v1417 = vpop.permute.xlu0 %1416
          %1420 = vrot.lane.b32.xlu0 %v1410, 24
          %v1421 = vpop.permute.xlu0 %1420
          %v1423 = vsel %vm878, %v1407, %v1413
          %v1424 = vsel %vm715, %v1423, %v1417
          %vm1425 = vcmask 195584
          %v1426 = vsel %vm1425, %v1424, %v1421
          %v1427 = vpack.c.bf16 %v1426, %v1426
          %v1428 = vld [vmem:[%s9] sm:$0xf]
          %v1429 = vld [vmem:[%s9 + $0x4] sm:$0xf]
          %v1430 = vld [vmem:[%s9 + $0x8] sm:$0xf]
          %v1431 = vld [vmem:[%s9 + $0xc] sm:$0xf]
          %v1432 = vld [vmem:[%s10] sm:$0x1]
          %v1434 = vlaneseq
          %v1435 = vshrl.u32 %v1434, 7
          %v1436 = vsub.s32 0, %v1435
          %v1437 = vrot.slane %v1432, %v1436
          %v1443 = vunpack.c.l.b16 %v1428
          %v1444 = vunpack.c.l.b16 %v1429
          %v1445 = vunpack.c.l.b16 %v1430
          %v1446 = vunpack.c.l.b16 %v1431
          %v1447 = vpack.c.b16 %v1444, %v1443
          %v1448 = vpack.c.b16 %v1446, %v1445
          %vm1451 = vcmask 261120
          %v1453 = vsel %vm1451, %v1427, 0
          %1455 = vmatprep.subr.bf16.mxu0 0
          %1456 = vmatpush1.bf16.msra.mxu0 0
          %1457 = vmatprep.subr.bf16.mxu0 0
          %1458 = vmatpush1.bf16.msra.mxu0 0
          %1459 = vmatprep.subr.bf16.mxu0 0
          %1460 = vmatpush1.bf16.msra.mxu0 0
          %1461 = vmatprep.subr.bf16.mxu0 0
          %1462 = vmatpush1.bf16.msra.mxu0 0
          %1463 = vmatprep.subr.bf16.mxu0 0
          %1464 = vmatpush1.bf16.msra.mxu0 0
          %1465 = vmatprep.subr.bf16.mxu0 0
          %1466 = vmatpush1.bf16.msra.mxu0 0
          %1467 = vmatprep.subr.bf16.mxu0 0
          %1468 = vmatpush1.bf16.msra.mxu0 %v1448
          %1469 = vmatprep.subr.bf16.mxu0 0
          %1470 = vmatpush1.bf16.msra.mxu0 %v1447
          %1471 = vmatprep.subr.bf16.mxu0 0
          %1472 = vmatpush2.bf16.msra.mxu0 0
          %1473 = vmatprep.subr.bf16.mxu0 0
          %1474 = vmatpush2.bf16.msra.mxu0 0
          %1475 = vmatprep.subr.bf16.mxu0 0
          %1476 = vmatpush2.bf16.msra.mxu0 0
          %1477 = vmatprep.subr.bf16.mxu0 0
          %1478 = vmatpush2.bf16.msra.mxu0 0
          %1479 = vmatprep.subr.bf16.mxu0 0
          %1480 = vmatpush2.bf16.msra.mxu0 0
          %1481 = vmatprep.subr.bf16.mxu0 0
          %1482 = vmatpush2.bf16.msra.mxu0 0
          %1483 = vmatprep.subr.bf16.mxu0 0
          %1484 = vmatpush2.bf16.msra.mxu0 0
          %1485 = vmatprep.subr.bf16.mxu0 0
          %1486 = vmatpush2.bf16.msra.mxu0 0
          %1487 = vmatprep.mubr.bf16.mxu0 0
          %1488 = vmatmul.mubr.bf16.gmra.mxu0 %v1453
          %v1489 = vpop.f32.mrf.mxu0
          %v1490 = vadd.f32 %v1437, %v1489
          %v1491 = vpop.f32.mrf.mxu0
          %v1492 = vpop.f32.mrf.mxu0
          %v1493 = vpop.f32.mrf.mxu0
          %1494 = vdwg.mxu0
          %1495 = vst.msk [vmem:[%s591] sm:$0xff] %vm1451, %v1490
        $region108: #{tpu_custom_call.1} parent=63 // pred_fallthru
          _
        %s1496 = sand.u32 %s315, 1
        %s1497 = scalar_lea.sflag [#allocation8], %s1496
        %s1498 = sand.u32 %s315, 1
        %s1499 = smul.addr %s1498, 8
        %s1500 = scalar_lea.vmem [#allocation21], %s1499
        // Predicated region
        $region109: #{tpu_custom_call.1} parent=63 // pred_check
          %p1501 = pneg %p325
        $region110: #{tpu_custom_call.1} parent=63 // pred_check_branch
          %1503 = sbr.rel (%p1501) target = $region112
        $region111: #{tpu_custom_call.1} parent=63 // pred_region
          %s1505 = ssub.s32 128, 128
          %1506 = vsyncadd %s1497, %s1505
          %s1507 = sadd.s32 %s40, %s39
          %s1508 = smul.addr %s1507, 128
          %s1509 = scalar_lea.hbm %s11, %s1508
          %s1511 = sshll.u32 %s1500, 4
          %s1512 = int_to_ptr.vmem [resolvable:$true] %s1511
          %1514 = dma.vmem_to_hbm [thread:$0]  %s1512, 128, %s1509, %s1497
        $region112: #{tpu_custom_call.1} parent=63 // pred_fallthru
          _
      $region64: #{tpu_custom_call.1} parent=5 // pred_fallthru
        _
      %p1515 = scmp.le.s32.totalorder 2, %s29
      // Predicated region
      $region113: #{tpu_custom_call.1} parent=5 // pred_check
        %p1516 = pneg %p1515
      $region114: #{tpu_custom_call.1} parent=5 // pred_check_branch
        %1518 = sbr.rel (%p1516) target = $region116
      $region115: #{tpu_custom_call.1} parent=5 // pred_region
        %s1519 = ssub.s32 %s29, 2
        // Predicated region
        $region117: #{tpu_custom_call.1} parent=115 // pred_check
          %p1520 = pneg %p331
        $region118: #{tpu_custom_call.1} parent=115 // pred_check_branch
          %1522 = sbr.rel (%p1520) target = $region120
        $region119: #{tpu_custom_call.1} parent=115 // pred_region
          %s1523 = sand.u32 %s316, 1
          %s1524 = scalar_lea.sflag [#allocation8], %s1523
          %s1525 = sand.u32 %s316, 1
          %s1526 = smul.addr %s1525, 8
          %s1527 = scalar_lea.vmem [#allocation21], %s1526
          %1528 = dma.done %s1524, 128
        $region120: #{tpu_custom_call.1} parent=115 // pred_fallthru
          _
      $region116: #{tpu_custom_call.1} parent=5 // pred_fallthru
        _
    $region6: #{tpu_custom_call.1} parent=1 // loop_footer
      %s33 = sadd.s32 1, %s29
    $region7: #{tpu_custom_call.1} parent=1 // loop_footer_branch
      %28 = sbr.rel target = $region3
    $region8: #{tpu_custom_call.1} parent=1 // loop_exit
      _
    %1529 = vsyncpa [#allocation7], 1
    %s1530 = scalar_lea.sflag [#allocation7], 1
    %1531 = vsyncpa %s1530, 1
    %1532 = vsyncpa [#allocation10], 1
    %s1533 = scalar_lea.sflag [#allocation10], 1
    %1534 = vsyncpa %s1533, 1
    %1535 = vsyncpa [#allocation13], 1
    %1536 = vsyncpa [#allocation16], 1
    %1537 = vsyncpa [#allocation19], 1
    %1538 = vsyncpa [#allocation8], 1
    %s1539 = scalar_lea.sflag [#allocation8], 1
    %1540 = vsyncpa %s1539, 1

</llo_original>
